<compile_context>
chip_gen: v7x
topology: tpu7x:2x2x1
jax: 0.10.0
libtpu: 0.0.40
codegen_flags: <defaults>
</compile_context>

<pallas_src>
import functools

import jax
import jax.numpy as jnp
import numpy as np
from jax.experimental import pallas as pl
from jax.experimental.pallas import tpu as pltpu

D_MODEL = 32
NUM_HEADS = 4
DIM_FF = 64
EPS = 1e-5  # nn.LayerNorm default

# ----------------------------- slab row layout -------------------------------
# Row r of the (rows, 128) f32 params slab (vectors start at lane 0):
#   0: bqkv (3E, softmax scale folded into Q part)   4: lin1 bias (DIM_FF)
#   1: out_proj bias (E)                             5: lin2 bias (E)
#   2: ln1 gamma (E)                                 6: ln2 gamma (E)
#   3: ln1 beta  (E)                                 7: ln2 beta  (E)
#   8 .. 8+M-1, lanes 0..M-1: additive batch-mask bias {0, -1e30}
_N_VEC_ROWS = 8


def _round_up(x, m):
    return (x + m - 1) // m * m


# ------------------------------ Fused kernel --------------------------------

def _fused_layer_kernel(x_ref, wa_ref, w2_ref, slab_ref, o_ref,
                        *, n_heads, head_dim, d_model, dim_ff, m_rows):
    """Entire encoder layer for a (M, E) activation slab, fully in VMEM.

    Rows of x are ordered (s, n) (row = s * n_batch + n); attention is
    computed per head on the full (M, M) score matrix with a precomputed
    additive batch-mask bias -- at M = 16 the masked extra work is negligible
    and everything stays 2-D / lane-friendly (no 4-D transposes in-kernel).
    """
    f32 = jnp.float32
    E, F, M = d_model, dim_ff, m_rows
    x = x_ref[...].astype(f32)                               # (M, E)

    # ---- static slices of the fused weight slab [Wqkv | Wo | W1] ----
    wqkv = wa_ref[:, 0:3 * E]                                # (E, 3E)
    wo   = wa_ref[:, 3 * E:4 * E]                            # (E, E)
    w1   = wa_ref[:, 4 * E:4 * E + F]                        # (E, F)

    # ---- static slices of the small-params slab ----
    bqkv = slab_ref[0:1, 0:3 * E]
    bo   = slab_ref[1:2, 0:E]
    g1   = slab_ref[2:3, 0:E]
    b1   = slab_ref[3:4, 0:E]
    bb1  = slab_ref[4:5, 0:F]
    bb2  = slab_ref[5:6, 0:E]
    g2   = slab_ref[6:7, 0:E]
    b2   = slab_ref[7:8, 0:E]
    mask_bias = slab_ref[_N_VEC_ROWS:_N_VEC_ROWS + M, 0:M]   # (M, M) {0,-1e30}

    # ---- QKV projection (softmax scale pre-folded into the Q columns) ----
    qkv = jnp.dot(x, wqkv, preferred_element_type=f32) + bqkv  # (M, 3E)

    # ---- multi-head attention: per-head scores/softmax/ctx, heads merged
    #      back to (M, E), then ONE output-projection matmul. ----
    ctx_heads = []
    for h in range(n_heads):                                  # static unroll
        lo = h * head_dim
        qh = qkv[:, lo:lo + head_dim]                         # (M, dh), scaled
        kh = qkv[:, E + lo:E + lo + head_dim]                 # (M, dh)
        vh = qkv[:, 2 * E + lo:2 * E + lo + head_dim]         # (M, dh)

        s = jax.lax.dot_general(qh, kh, (((1,), (1,)), ((), ())),
                                preferred_element_type=f32)   # (M, M)
        s = s + mask_bias                                     # batch masking
        s = s - jnp.max(s, axis=-1, keepdims=True)
        p = jnp.exp(s)
        p = p / jnp.sum(p, axis=-1, keepdims=True)            # exact softmax
        ctx_heads.append(jnp.dot(p, vh, preferred_element_type=f32))
    ctx = jnp.concatenate(ctx_heads, axis=-1)                 # (M, E)
    attn = jnp.dot(ctx, wo, preferred_element_type=f32) + bo  # (M, E)

    # ---- residual + LayerNorm 1 (dropout1 = identity) ----
    y = x + attn
    mu = jnp.mean(y, axis=-1, keepdims=True)
    var = jnp.mean((y - mu) ** 2, axis=-1, keepdims=True)
    x1 = (y - mu) * jax.lax.rsqrt(var + EPS) * g1 + b1

    # ---- FFN: linear1 -> ReLU -> linear2 (inner dropout = identity) ----
    h1 = jnp.dot(x1, w1, preferred_element_type=f32) + bb1
    h1 = jnp.maximum(h1, 0.0)
    ff = jnp.dot(h1, w2_ref[...], preferred_element_type=f32) + bb2

    # ---- residual + LayerNorm 2 (dropout2 = identity) ----
    y2 = x1 + ff
    mu2 = jnp.mean(y2, axis=-1, keepdims=True)
    var2 = jnp.mean((y2 - mu2) ** 2, axis=-1, keepdims=True)
    o_ref[...] = ((y2 - mu2) * jax.lax.rsqrt(var2 + EPS) * g2 + b2
                  ).astype(o_ref.dtype)


# ------------------------------- Param prep ----------------------------------

def prepare_fused_params(p, seq_len, batch):
    """One-time prep: transpose weights to (K, N), fold the 1/sqrt(dh) softmax
    scale into the Q columns, fuse [Wqkv|Wo|W1] along lanes, and pack every
    small vector plus the precomputed batch-mask bias into one (rows,128) slab.
    """
    E, H, F = D_MODEL, NUM_HEADS, DIM_FF
    dh = E // H
    M = seq_len * batch
    scale = 1.0 / float(np.sqrt(dh))

    col_scale = np.concatenate([np.full(E, scale, np.float32),
                                np.ones(2 * E, np.float32)])
    wqkv = np.asarray(p['in_proj_w'], np.float32).T * col_scale[None, :]  # (E,3E)
    bqkv = np.asarray(p['in_proj_b'], np.float32) * col_scale             # (3E,)
    wo = np.asarray(p['out_proj_w'], np.float32).T                        # (E,E)
    w1 = np.asarray(p['lin1_w'], np.float32).T                            # (E,F)
    w2 = np.asarray(p['lin2_w'], np.float32).T                            # (F,E)

    wa = np.concatenate([wqkv, wo, w1], axis=1)               # (E, 3E+E+F)

    slab_rows = _round_up(_N_VEC_ROWS + M, 8)
    slab = np.zeros((slab_rows, 128), np.float32)
    slab[0, :3 * E] = bqkv
    slab[1, :E] = np.asarray(p['out_proj_b'], np.float32)
    slab[2, :E] = np.asarray(p['ln1_g'], np.float32)
    slab[3, :E] = np.asarray(p['ln1_b'], np.float32)
    slab[4, :F] = np.asarray(p['lin1_b'], np.float32)
    slab[5, :E] = np.asarray(p['lin2_b'], np.float32)
    slab[6, :E] = np.asarray(p['ln2_g'], np.float32)
    slab[7, :E] = np.asarray(p['ln2_b'], np.float32)
    # Additive batch-mask bias: rows i, j interact iff i % batch == j % batch.
    rb = np.arange(M)[:, None] % batch
    cb = np.arange(M)[None, :] % batch
    slab[_N_VEC_ROWS:_N_VEC_ROWS + M, :M] = np.where(rb == cb, 0.0,
                                                     -1e30).astype(np.float32)

    return {'wa': jnp.asarray(wa), 'w2': jnp.asarray(w2),
            'slab': jnp.asarray(slab)}


# ------------------------------- Forward pass --------------------------------

def transformer_forward(src, fp):
    S, N, E = src.shape
    M = S * N
    x2d = src.reshape(M, E)
    kernel = functools.partial(_fused_layer_kernel,
                               n_heads=NUM_HEADS, head_dim=E // NUM_HEADS,
                               d_model=E, dim_ff=DIM_FF, m_rows=M)
    out = pl.pallas_call(
        kernel,
        out_shape=jax.ShapeDtypeStruct((M, E), src.dtype),
        in_specs=[pl.BlockSpec(memory_space=pltpu.MemorySpace.VMEM)] * 4,
        out_specs=pl.BlockSpec(memory_space=pltpu.MemorySpace.VMEM),
    )(x2d, fp['wa'], fp['w2'], fp['slab'])
    return out.reshape(S, N, E)


# ------------------------------ Pure-JAX reference ---------------------------

def reference_forward(src, p):
    S, N, E = src.shape
    H = NUM_HEADS
    dh = E // H
    x = src.reshape(S * N, E)
    qkv = x @ p['in_proj_w'].T + p['in_proj_b']
    q, k, v = jnp.split(qkv, 3, axis=-1)

    def th(t):
        return t.reshape(S, N, H, dh).transpose(1, 2, 0, 3)

    qh, kh, vh = th(q), th(k), th(v)
    s = jnp.einsum('bhqd,bhkd->bhqk', qh, kh) / np.sqrt(dh)
    pattn = jax.nn.softmax(s, axis=-1)
    oh = jnp.einsum('bhqk,bhkd->bhqd', pattn, vh)
    o = oh.transpose(2, 0, 1, 3).reshape(S * N, E)
    attn_out = o @ p['out_proj_w'].T + p['out_proj_b']

    def ln(y, g, b):
        m = y.mean(-1, keepdims=True)
        var = ((y - m) ** 2).mean(-1, keepdims=True)
        return (y - m) / jnp.sqrt(var + EPS) * g + b

    x = ln(x + attn_out, p['ln1_g'], p['ln1_b'])
    h = jnp.maximum(x @ p['lin1_w'].T + p['lin1_b'], 0.0)
    ff = h @ p['lin2_w'].T + p['lin2_b']
    x = ln(x + ff, p['ln2_g'], p['ln2_b'])
    return x.reshape(S, N, E)


# ----------------------------------- Main ------------------------------------

def init_params(key):
    ks = jax.random.split(key, 6)
    sc = 0.05
    return {
        'in_proj_w':  sc * jax.random.normal(ks[0], (3 * D_MODEL, D_MODEL), jnp.float32),
        'in_proj_b':  sc * jax.random.normal(ks[1], (3 * D_MODEL,), jnp.float32),
        'out_proj_w': sc * jax.random.normal(ks[2], (D_MODEL, D_MODEL), jnp.float32),
        'out_proj_b': jnp.zeros((D_MODEL,), jnp.float32),
        'lin1_w':     sc * jax.random.normal(ks[3], (DIM_FF, D_MODEL), jnp.float32),
        'lin1_b':     sc * jax.random.normal(ks[4], (DIM_FF,), jnp.float32),
        'lin2_w':     sc * jax.random.normal(ks[5], (D_MODEL, DIM_FF), jnp.float32),
        'lin2_b':     jnp.zeros((D_MODEL,), jnp.float32),
        'ln1_g':      jnp.ones((D_MODEL,), jnp.float32),
        'ln1_b':      jnp.zeros((D_MODEL,), jnp.float32),
        'ln2_g':      jnp.ones((D_MODEL,), jnp.float32),
        'ln2_b':      jnp.zeros((D_MODEL,), jnp.float32),
    }


if __name__ == "__main__":
    key = jax.random.PRNGKey(0)
    kx, kp = jax.random.split(key)
    S, N = 8, 2                       # seq_len=8, batch=2, d_model=32
    src = jax.random.normal(kx, (S, N, D_MODEL), jnp.float32)
    params = init_params(kp)
    fused_params = prepare_fused_params(params, S, N)   # one-time weight prep

    out = transformer_forward(src, fused_params)
    out = jax.block_until_ready(out)

    ref = reference_forward(src, params)
    # Exact softmax divide -> everything is plain fp32; only op-ordering
    # differences (folded scale, per-head vs batched einsum) remain.
    np.testing.assert_allclose(np.asarray(out), np.asarray(ref),
                               rtol=1e-4, atol=1e-4)
    print("KERNEL_OK")
</pallas_src>

<mosaic_0001>
module attributes {stable_mosaic.version = 11 : i64} {
  func.func @_fused_layer_kernel(%arg0: memref<16x32xf32, #tpu.memory_space<vmem>>, %arg1: memref<32x192xf32, #tpu.memory_space<vmem>>, %arg2: memref<64x32xf32, #tpu.memory_space<vmem>>, %arg3: memref<24x128xf32, #tpu.memory_space<vmem>>, %arg4: memref<16x32xf32, #tpu.memory_space<vmem>>) attributes {dimension_semantics = [], scalar_prefetch = 0 : i64, scratch_operands = 0 : i64, tpu.core_type = #tpu.core_type<tc>} {
    %c0 = arith.constant 0 : index
    %c0_0 = arith.constant 0 : index
    %0 = vector.load %arg0[%c0, %c0_0] : memref<16x32xf32, #tpu.memory_space<vmem>>, vector<16x32xf32>
    %c0_1 = arith.constant 0 : index
    %c0_2 = arith.constant 0 : index
    %1 = vector.load %arg1[%c0_1, %c0_2] : memref<32x192xf32, #tpu.memory_space<vmem>>, vector<32x96xf32>
    %c0_3 = arith.constant 0 : index
    %c96 = arith.constant 96 : index
    %2 = vector.load %arg1[%c0_3, %c96] : memref<32x192xf32, #tpu.memory_space<vmem>>, vector<32x32xf32>
    %c0_4 = arith.constant 0 : index
    %c128 = arith.constant 128 : index
    %3 = vector.load %arg1[%c0_4, %c128] : memref<32x192xf32, #tpu.memory_space<vmem>>, vector<32x64xf32>
    %c0_5 = arith.constant 0 : index
    %c0_6 = arith.constant 0 : index
    %4 = vector.load %arg3[%c0_5, %c0_6] : memref<24x128xf32, #tpu.memory_space<vmem>>, vector<1x96xf32>
    %c1 = arith.constant 1 : index
    %c0_7 = arith.constant 0 : index
    %5 = vector.load %arg3[%c1, %c0_7] : memref<24x128xf32, #tpu.memory_space<vmem>>, vector<1x32xf32>
    %c2 = arith.constant 2 : index
    %c0_8 = arith.constant 0 : index
    %6 = vector.load %arg3[%c2, %c0_8] : memref<24x128xf32, #tpu.memory_space<vmem>>, vector<1x32xf32>
    %c3 = arith.constant 3 : index
    %c0_9 = arith.constant 0 : index
    %7 = vector.load %arg3[%c3, %c0_9] : memref<24x128xf32, #tpu.memory_space<vmem>>, vector<1x32xf32>
    %c4 = arith.constant 4 : index
    %c0_10 = arith.constant 0 : index
    %8 = vector.load %arg3[%c4, %c0_10] : memref<24x128xf32, #tpu.memory_space<vmem>>, vector<1x64xf32>
    %c5 = arith.constant 5 : index
    %c0_11 = arith.constant 0 : index
    %9 = vector.load %arg3[%c5, %c0_11] : memref<24x128xf32, #tpu.memory_space<vmem>>, vector<1x32xf32>
    %c6 = arith.constant 6 : index
    %c0_12 = arith.constant 0 : index
    %10 = vector.load %arg3[%c6, %c0_12] : memref<24x128xf32, #tpu.memory_space<vmem>>, vector<1x32xf32>
    %c7 = arith.constant 7 : index
    %c0_13 = arith.constant 0 : index
    %11 = vector.load %arg3[%c7, %c0_13] : memref<24x128xf32, #tpu.memory_space<vmem>>, vector<1x32xf32>
    %c8 = arith.constant 8 : index
    %c0_14 = arith.constant 0 : index
    %12 = vector.load %arg3[%c8, %c0_14] : memref<24x128xf32, #tpu.memory_space<vmem>>, vector<16x16xf32>
    %cst = arith.constant dense<0.000000e+00> : vector<16x96xf32>
    %13 = tpu.matmul %0, %1, %cst {dimension_numbers = #tpu.dot_dimension_numbers<[1], [0], [0], [1], [0, 0, 1, 1], [], []>} : vector<16x32xf32>, vector<32x96xf32>, vector<16x96xf32> -> vector<16x96xf32>
    %14 = vector.broadcast %4 : vector<1x96xf32> to vector<16x96xf32>
    %15 = arith.addf %13, %14 : vector<16x96xf32>
    %16 = vector.extract_strided_slice %15 {offsets = [0, 0], sizes = [16, 8], strides = [1, 1]} : vector<16x96xf32> to vector<16x8xf32>
    %17 = vector.extract_strided_slice %15 {offsets = [0, 32], sizes = [16, 8], strides = [1, 1]} : vector<16x96xf32> to vector<16x8xf32>
    %18 = vector.extract_strided_slice %15 {offsets = [0, 64], sizes = [16, 8], strides = [1, 1]} : vector<16x96xf32> to vector<16x8xf32>
    %cst_15 = arith.constant dense<0.000000e+00> : vector<16x16xf32>
    %19 = tpu.matmul %16, %17, %cst_15 {dimension_numbers = #tpu.dot_dimension_numbers<[1], [1], [0], [0], [0, 0, 1, 0], [], []>} : vector<16x8xf32>, vector<16x8xf32>, vector<16x16xf32> -> vector<16x16xf32>
    %20 = arith.addf %19, %12 : vector<16x16xf32>
    %cst_16 = arith.constant dense<0xFF800000> : vector<16xf32>
    %21 = vector.multi_reduction <maximumf>, %20, %cst_16 [1] : vector<16x16xf32> to vector<16xf32>
    %22 = vector.shape_cast %21 : vector<16xf32> to vector<16x1xf32>
    %23 = vector.broadcast %22 : vector<16x1xf32> to vector<16x16xf32>
    %24 = arith.subf %20, %23 : vector<16x16xf32>
    %25 = math.exp %24 : vector<16x16xf32>
    %cst_17 = arith.constant dense<0.000000e+00> : vector<16xf32>
    %26 = vector.multi_reduction <add>, %25, %cst_17 [1] : vector<16x16xf32> to vector<16xf32>
    %27 = vector.shape_cast %26 : vector<16xf32> to vector<16x1xf32>
    %28 = vector.broadcast %27 : vector<16x1xf32> to vector<16x16xf32>
    %29 = arith.divf %25, %28 : vector<16x16xf32>
    %cst_18 = arith.constant dense<0.000000e+00> : vector<16x8xf32>
    %30 = tpu.matmul %29, %18, %cst_18 {dimension_numbers = #tpu.dot_dimension_numbers<[1], [0], [0], [1], [0, 0, 1, 1], [], []>} : vector<16x16xf32>, vector<16x8xf32>, vector<16x8xf32> -> vector<16x8xf32>
    %31 = vector.extract_strided_slice %15 {offsets = [0, 8], sizes = [16, 8], strides = [1, 1]} : vector<16x96xf32> to vector<16x8xf32>
    %32 = vector.extract_strided_slice %15 {offsets = [0, 40], sizes = [16, 8], strides = [1, 1]} : vector<16x96xf32> to vector<16x8xf32>
    %33 = vector.extract_strided_slice %15 {offsets = [0, 72], sizes = [16, 8], strides = [1, 1]} : vector<16x96xf32> to vector<16x8xf32>
    %cst_19 = arith.constant dense<0.000000e+00> : vector<16x16xf32>
    %34 = tpu.matmul %31, %32, %cst_19 {dimension_numbers = #tpu.dot_dimension_numbers<[1], [1], [0], [0], [0, 0, 1, 0], [], []>} : vector<16x8xf32>, vector<16x8xf32>, vector<16x16xf32> -> vector<16x16xf32>
    %35 = arith.addf %34, %12 : vector<16x16xf32>
    %cst_20 = arith.constant dense<0xFF800000> : vector<16xf32>
    %36 = vector.multi_reduction <maximumf>, %35, %cst_20 [1] : vector<16x16xf32> to vector<16xf32>
    %37 = vector.shape_cast %36 : vector<16xf32> to vector<16x1xf32>
    %38 = vector.broadcast %37 : vector<16x1xf32> to vector<16x16xf32>
    %39 = arith.subf %35, %38 : vector<16x16xf32>
    %40 = math.exp %39 : vector<16x16xf32>
    %cst_21 = arith.constant dense<0.000000e+00> : vector<16xf32>
    %41 = vector.multi_reduction <add>, %40, %cst_21 [1] : vector<16x16xf32> to vector<16xf32>
    %42 = vector.shape_cast %41 : vector<16xf32> to vector<16x1xf32>
    %43 = vector.broadcast %42 : vector<16x1xf32> to vector<16x16xf32>
    %44 = arith.divf %40, %43 : vector<16x16xf32>
    %cst_22 = arith.constant dense<0.000000e+00> : vector<16x8xf32>
    %45 = tpu.matmul %44, %33, %cst_22 {dimension_numbers = #tpu.dot_dimension_numbers<[1], [0], [0], [1], [0, 0, 1, 1], [], []>} : vector<16x16xf32>, vector<16x8xf32>, vector<16x8xf32> -> vector<16x8xf32>
    %46 = vector.extract_strided_slice %15 {offsets = [0, 16], sizes = [16, 8], strides = [1, 1]} : vector<16x96xf32> to vector<16x8xf32>
    %47 = vector.extract_strided_slice %15 {offsets = [0, 48], sizes = [16, 8], strides = [1, 1]} : vector<16x96xf32> to vector<16x8xf32>
    %48 = vector.extract_strided_slice %15 {offsets = [0, 80], sizes = [16, 8], strides = [1, 1]} : vector<16x96xf32> to vector<16x8xf32>
    %cst_23 = arith.constant dense<0.000000e+00> : vector<16x16xf32>
    %49 = tpu.matmul %46, %47, %cst_23 {dimension_numbers = #tpu.dot_dimension_numbers<[1], [1], [0], [0], [0, 0, 1, 0], [], []>} : vector<16x8xf32>, vector<16x8xf32>, vector<16x16xf32> -> vector<16x16xf32>
    %50 = arith.addf %49, %12 : vector<16x16xf32>
    %cst_24 = arith.constant dense<0xFF800000> : vector<16xf32>
    %51 = vector.multi_reduction <maximumf>, %50, %cst_24 [1] : vector<16x16xf32> to vector<16xf32>
    %52 = vector.shape_cast %51 : vector<16xf32> to vector<16x1xf32>
    %53 = vector.broadcast %52 : vector<16x1xf32> to vector<16x16xf32>
    %54 = arith.subf %50, %53 : vector<16x16xf32>
    %55 = math.exp %54 : vector<16x16xf32>
    %cst_25 = arith.constant dense<0.000000e+00> : vector<16xf32>
    %56 = vector.multi_reduction <add>, %55, %cst_25 [1] : vector<16x16xf32> to vector<16xf32>
    %57 = vector.shape_cast %56 : vector<16xf32> to vector<16x1xf32>
    %58 = vector.broadcast %57 : vector<16x1xf32> to vector<16x16xf32>
    %59 = arith.divf %55, %58 : vector<16x16xf32>
    %cst_26 = arith.constant dense<0.000000e+00> : vector<16x8xf32>
    %60 = tpu.matmul %59, %48, %cst_26 {dimension_numbers = #tpu.dot_dimension_numbers<[1], [0], [0], [1], [0, 0, 1, 1], [], []>} : vector<16x16xf32>, vector<16x8xf32>, vector<16x8xf32> -> vector<16x8xf32>
    %61 = vector.extract_strided_slice %15 {offsets = [0, 24], sizes = [16, 8], strides = [1, 1]} : vector<16x96xf32> to vector<16x8xf32>
    %62 = vector.extract_strided_slice %15 {offsets = [0, 56], sizes = [16, 8], strides = [1, 1]} : vector<16x96xf32> to vector<16x8xf32>
    %63 = vector.extract_strided_slice %15 {offsets = [0, 88], sizes = [16, 8], strides = [1, 1]} : vector<16x96xf32> to vector<16x8xf32>
    %cst_27 = arith.constant dense<0.000000e+00> : vector<16x16xf32>
    %64 = tpu.matmul %61, %62, %cst_27 {dimension_numbers = #tpu.dot_dimension_numbers<[1], [1], [0], [0], [0, 0, 1, 0], [], []>} : vector<16x8xf32>, vector<16x8xf32>, vector<16x16xf32> -> vector<16x16xf32>
    %65 = arith.addf %64, %12 : vector<16x16xf32>
    %cst_28 = arith.constant dense<0xFF800000> : vector<16xf32>
    %66 = vector.multi_reduction <maximumf>, %65, %cst_28 [1] : vector<16x16xf32> to vector<16xf32>
    %67 = vector.shape_cast %66 : vector<16xf32> to vector<16x1xf32>
    %68 = vector.broadcast %67 : vector<16x1xf32> to vector<16x16xf32>
    %69 = arith.subf %65, %68 : vector<16x16xf32>
    %70 = math.exp %69 : vector<16x16xf32>
    %cst_29 = arith.constant dense<0.000000e+00> : vector<16xf32>
    %71 = vector.multi_reduction <add>, %70, %cst_29 [1] : vector<16x16xf32> to vector<16xf32>
    %72 = vector.shape_cast %71 : vector<16xf32> to vector<16x1xf32>
    %73 = vector.broadcast %72 : vector<16x1xf32> to vector<16x16xf32>
    %74 = arith.divf %70, %73 : vector<16x16xf32>
    %cst_30 = arith.constant dense<0.000000e+00> : vector<16x8xf32>
    %75 = tpu.matmul %74, %63, %cst_30 {dimension_numbers = #tpu.dot_dimension_numbers<[1], [0], [0], [1], [0, 0, 1, 1], [], []>} : vector<16x16xf32>, vector<16x8xf32>, vector<16x8xf32> -> vector<16x8xf32>
    %76 = tpu.concatenate %30, %45, %60, %75 in 1 : vector<16x8xf32>, vector<16x8xf32>, vector<16x8xf32>, vector<16x8xf32> -> vector<16x32xf32>
    %cst_31 = arith.constant dense<0.000000e+00> : vector<16x32xf32>
    %77 = tpu.matmul %76, %2, %cst_31 {dimension_numbers = #tpu.dot_dimension_numbers<[1], [0], [0], [1], [0, 0, 1, 1], [], []>} : vector<16x32xf32>, vector<32x32xf32>, vector<16x32xf32> -> vector<16x32xf32>
    %78 = vector.broadcast %5 : vector<1x32xf32> to vector<16x32xf32>
    %79 = arith.addf %77, %78 : vector<16x32xf32>
    %80 = arith.addf %0, %79 : vector<16x32xf32>
    %cst_32 = arith.constant dense<0.000000e+00> : vector<16xf32>
    %81 = vector.multi_reduction <add>, %80, %cst_32 [1] : vector<16x32xf32> to vector<16xf32>
    %82 = vector.shape_cast %81 : vector<16xf32> to vector<16x1xf32>
    %cst_33 = arith.constant 3.200000e+01 : f32
    %83 = vector.broadcast %cst_33 : f32 to vector<16x1xf32>
    %84 = arith.divf %82, %83 : vector<16x1xf32>
    %85 = vector.broadcast %84 : vector<16x1xf32> to vector<16x32xf32>
    %86 = arith.subf %80, %85 : vector<16x32xf32>
    %87 = arith.mulf %86, %86 : vector<16x32xf32>
    %cst_34 = arith.constant dense<0.000000e+00> : vector<16xf32>
    %88 = vector.multi_reduction <add>, %87, %cst_34 [1] : vector<16x32xf32> to vector<16xf32>
    %89 = vector.shape_cast %88 : vector<16xf32> to vector<16x1xf32>
    %cst_35 = arith.constant 3.200000e+01 : f32
    %90 = vector.broadcast %cst_35 : f32 to vector<16x1xf32>
    %91 = arith.divf %89, %90 : vector<16x1xf32>
    %92 = vector.broadcast %84 : vector<16x1xf32> to vector<16x32xf32>
    %93 = arith.subf %80, %92 : vector<16x32xf32>
    %cst_36 = arith.constant 9.99999974E-6 : f32
    %94 = vector.broadcast %cst_36 : f32 to vector<16x1xf32>
    %95 = arith.addf %91, %94 : vector<16x1xf32>
    %96 = math.rsqrt %95 : vector<16x1xf32>
    %97 = vector.broadcast %96 : vector<16x1xf32> to vector<16x32xf32>
    %98 = arith.mulf %93, %97 : vector<16x32xf32>
    %99 = vector.broadcast %6 : vector<1x32xf32> to vector<16x32xf32>
    %100 = arith.mulf %98, %99 : vector<16x32xf32>
    %101 = vector.broadcast %7 : vector<1x32xf32> to vector<16x32xf32>
    %102 = arith.addf %100, %101 : vector<16x32xf32>
    %cst_37 = arith.constant dense<0.000000e+00> : vector<16x64xf32>
    %103 = tpu.matmul %102, %3, %cst_37 {dimension_numbers = #tpu.dot_dimension_numbers<[1], [0], [0], [1], [0, 0, 1, 1], [], []>} : vector<16x32xf32>, vector<32x64xf32>, vector<16x64xf32> -> vector<16x64xf32>
    %104 = vector.broadcast %8 : vector<1x64xf32> to vector<16x64xf32>
    %105 = arith.addf %103, %104 : vector<16x64xf32>
    %cst_38 = arith.constant 0.000000e+00 : f32
    %106 = vector.broadcast %cst_38 : f32 to vector<16x64xf32>
    %107 = arith.maximumf %105, %106 : vector<16x64xf32>
    %c0_39 = arith.constant 0 : index
    %c0_40 = arith.constant 0 : index
    %108 = vector.load %arg2[%c0_39, %c0_40] : memref<64x32xf32, #tpu.memory_space<vmem>>, vector<64x32xf32>
    %cst_41 = arith.constant dense<0.000000e+00> : vector<16x32xf32>
    %109 = tpu.matmul %107, %108, %cst_41 {dimension_numbers = #tpu.dot_dimension_numbers<[1], [0], [0], [1], [0, 0, 1, 1], [], []>} : vector<16x64xf32>, vector<64x32xf32>, vector<16x32xf32> -> vector<16x32xf32>
    %110 = vector.broadcast %9 : vector<1x32xf32> to vector<16x32xf32>
    %111 = arith.addf %109, %110 : vector<16x32xf32>
    %112 = arith.addf %102, %111 : vector<16x32xf32>
    %cst_42 = arith.constant dense<0.000000e+00> : vector<16xf32>
    %113 = vector.multi_reduction <add>, %112, %cst_42 [1] : vector<16x32xf32> to vector<16xf32>
    %114 = vector.shape_cast %113 : vector<16xf32> to vector<16x1xf32>
    %cst_43 = arith.constant 3.200000e+01 : f32
    %115 = vector.broadcast %cst_43 : f32 to vector<16x1xf32>
    %116 = arith.divf %114, %115 : vector<16x1xf32>
    %117 = vector.broadcast %116 : vector<16x1xf32> to vector<16x32xf32>
    %118 = arith.subf %112, %117 : vector<16x32xf32>
    %119 = arith.mulf %118, %118 : vector<16x32xf32>
    %cst_44 = arith.constant dense<0.000000e+00> : vector<16xf32>
    %120 = vector.multi_reduction <add>, %119, %cst_44 [1] : vector<16x32xf32> to vector<16xf32>
    %121 = vector.shape_cast %120 : vector<16xf32> to vector<16x1xf32>
    %cst_45 = arith.constant 3.200000e+01 : f32
    %122 = vector.broadcast %cst_45 : f32 to vector<16x1xf32>
    %123 = arith.divf %121, %122 : vector<16x1xf32>
    %124 = vector.broadcast %116 : vector<16x1xf32> to vector<16x32xf32>
    %125 = arith.subf %112, %124 : vector<16x32xf32>
    %cst_46 = arith.constant 9.99999974E-6 : f32
    %126 = vector.broadcast %cst_46 : f32 to vector<16x1xf32>
    %127 = arith.addf %123, %126 : vector<16x1xf32>
    %128 = math.rsqrt %127 : vector<16x1xf32>
    %129 = vector.broadcast %128 : vector<16x1xf32> to vector<16x32xf32>
    %130 = arith.mulf %125, %129 : vector<16x32xf32>
    %131 = vector.broadcast %10 : vector<1x32xf32> to vector<16x32xf32>
    %132 = arith.mulf %130, %131 : vector<16x32xf32>
    %133 = vector.broadcast %11 : vector<1x32xf32> to vector<16x32xf32>
    %134 = arith.addf %132, %133 : vector<16x32xf32>
    %c0_47 = arith.constant 0 : index
    %c0_48 = arith.constant 0 : index
    %135 = vector.load %arg4[%c0_47, %c0_48] : memref<16x32xf32, #tpu.memory_space<vmem>>, vector<16x32xf32>
    tpu.vector_store %arg4[%c0_47, %c0_48], %134 {strides = array<i32>} : memref<16x32xf32, #tpu.memory_space<vmem>>, vector<16x32xf32>,
    return
  }
}

</mosaic_0001>

<llo_original>
// kernel: tpu_custom_call.1
$region0: #{tpu_custom_call.1}
  #allocation0 [shape = 'u32[]', space=smem, size = 0x4, offset = 0x4, fixed_abs, tag = 'smem constant byte address 0x4 - core index']
  #allocation1 [shape = 'u32[144,128]{1,0:T(1,128)}', space=vmem, size = 0x12000, scoped, tag = 'internal scratch']
  %s0 = inlined_call_operand.hbm [shape: f32[16,32], index: 0, kind: input, shape index: {}]
  %s1 = inlined_call_operand.vmem [shape: f32[32,192], index: 1, kind: input, shape index: {}]
  %s2 = inlined_call_operand.vmem [shape: f32[64,32], index: 2, kind: input, shape index: {}]
  %s3 = inlined_call_operand.vmem [shape: f32[24,128], index: 3, kind: input, shape index: {}]
  %s4 = inlined_call_operand.hbm [shape: f32[16,32], index: 4, kind: output, shape index: {}]
  %s5 = sld [smem:[#allocation0]]
  $region30: #{tpu_custom_call.1} parent=0
    _
  %s7 = ssub.s32 1, %s5
  %s8 = scalar_select 0, %s7, %s5
  $region1: #{tpu_custom_call.1} parent=0
    #allocation2 [shape = 'u8[8192]{0}', space=vmem, size = 0x2000, scoped, tag = 'input window, operand 0, single buffered']
    #allocation3 [shape = 's32[1]{0}', space=sflag, size = 0x4, scoped, tag = 'scoped memory for tpu_custom_call.1']
    #allocation4 [shape = 's32[1]{0}', space=sflag, size = 0x4, scoped, tag = 'scoped memory for tpu_custom_call.1']
    #allocation5 [shape = 'u8[8192]{0}', space=vmem, size = 0x2000, scoped, tag = 'output window, operand 0, single buffered']
    %9 = vsyncpa [#allocation3], 0
    %10 = vsyncpa [#allocation4], 0
    // Predicated region
    $region2: #{tpu_custom_call.1} parent=1 // pred_check
      _
    $region3: #{tpu_custom_call.1} parent=1 // pred_check_branch
      %12 = sbr.rel (0) target = $region5
    $region4: #{tpu_custom_call.1} parent=1 // pred_region
      %s14 = ssub.s32 256, 256
      %15 = vsyncadd [#allocation3], %s14
      %s16 = sshll.u32 [#allocation2], 4
      %s17 = int_to_ptr.vmem [resolvable:$true] %s16
      %22 = dma.hbm_to_vmem [thread:$0]  %s0, 256, %s17, [#allocation3], 128, 128, 8
    $region5: #{tpu_custom_call.1} parent=1 // pred_fallthru
      _
    // Predicated region
    $region6: #{tpu_custom_call.1} parent=1 // pred_check
      _
    $region7: #{tpu_custom_call.1} parent=1 // pred_check_branch
      %24 = sbr.rel (0) target = $region9
    $region8: #{tpu_custom_call.1} parent=1 // pred_region
      _
    $region9: #{tpu_custom_call.1} parent=1 // pred_fallthru
      _
    // Predicated region
    $region10: #{tpu_custom_call.1} parent=1 // pred_check
      _
    $region11: #{tpu_custom_call.1} parent=1 // pred_check_branch
      %26 = sbr.rel (0) target = $region13
    $region12: #{tpu_custom_call.1} parent=1 // pred_region
      _
    $region13: #{tpu_custom_call.1} parent=1 // pred_fallthru
      _
    // Predicated region
    $region14: #{tpu_custom_call.1} parent=1 // pred_check
      _
    $region15: #{tpu_custom_call.1} parent=1 // pred_check_branch
      %28 = sbr.rel (0) target = $region17
    $region16: #{tpu_custom_call.1} parent=1 // pred_region
      _
    $region17: #{tpu_custom_call.1} parent=1 // pred_fallthru
      _
    // Predicated region
    $region18: #{tpu_custom_call.1} parent=1 // pred_check
      _
    $region19: #{tpu_custom_call.1} parent=1 // pred_check_branch
      %30 = sbr.rel (0) target = $region21
    $region20: #{tpu_custom_call.1} parent=1 // pred_region
      %31 = dma.done [#allocation3], 256
    $region21: #{tpu_custom_call.1} parent=1 // pred_fallthru
      _
    %v32 = vld [vmem:[#allocation2] sm:$0xff]
    %v33 = vld [vmem:[#allocation2 + $0x8] sm:$0xff]
    %v34 = vld [vmem:[%s1] sm:$0xff]
    %v35 = vld [vmem:[%s1 + $0x10] sm:$0xff]
    %v36 = vld [vmem:[%s1 + $0x20] sm:$0xff]
    %v37 = vld [vmem:[%s1 + $0x30] sm:$0xff]
    %v38 = vld [vmem:[%s1 + $0x8] sm:$0xff]
    %v39 = vld [vmem:[%s1 + $0x18] sm:$0xff]
    %v40 = vld [vmem:[%s1 + $0x28] sm:$0xff]
    %v41 = vld [vmem:[%s1 + $0x38] sm:$0xff]
    %v42 = vld [vmem:[%s3] sm:$0x1]
    %v43 = vld [vmem:[%s3 + $0x1] sm:$0x1]
    %v44 = vld [vmem:[%s3 + $0x2] sm:$0x1]
    %v45 = vld [vmem:[%s3 + $0x3] sm:$0x1]
    %v46 = vld [vmem:[%s3 + $0x4] sm:$0x1]
    %v47 = vld [vmem:[%s3 + $0x5] sm:$0x1]
    %v48 = vld [vmem:[%s3 + $0x6] sm:$0x1]
    %v49 = vld [vmem:[%s3 + $0x7] sm:$0x1]
    %v50 = vld [vmem:[%s3 + $0x8] sm:$0xff]
    %v51 = vld [vmem:[%s3 + $0x10] sm:$0xff]
    %v52 = vlaneseq
    %v53 = vshrl.u32 %v52, 7
    %v54 = vsub.s32 0, %v53
    %v55 = vrot.slane %v42, %v54
    %vm56 = vcmask 261120
    %v58 = vsel %vm56, %v32, 0
    %v61 = vsel %vm56, %v33, 0
    %63 = vmatprep.subr.mxu0 0.0
    %64 = vmatpush1.msra.mxu0 %v34
    %65 = vmatprep.subr.mxu0 0.0
    %66 = vmatpush1.msra.mxu0 %v35
    %67 = vmatprep.subr.mxu0 0.0
    %68 = vmatpush1.msra.mxu0 %v36
    %69 = vmatprep.subr.mxu0 0.0
    %70 = vmatpush1.msra.mxu0 %v37
    %71 = vmatprep.subr.mxu0 0.0
    %72 = vmatpush1.msra.mxu0 0.0
    %73 = vmatprep.subr.mxu0 0.0
    %74 = vmatpush1.msra.mxu0 0.0
    %75 = vmatprep.subr.mxu0 0.0
    %76 = vmatpush1.msra.mxu0 0.0
    %77 = vmatprep.subr.mxu0 0.0
    %78 = vmatpush1.msra.mxu0 0.0
    %79 = vmatprep.subr.mxu0 0.0
    %80 = vmatpush1.msra.mxu0 0.0
    %81 = vmatprep.subr.mxu0 0.0
    %82 = vmatpush1.msra.mxu0 0.0
    %83 = vmatprep.subr.mxu0 0.0
    %84 = vmatpush1.msra.mxu0 0.0
    %85 = vmatprep.subr.mxu0 0.0
    %86 = vmatpush1.msra.mxu0 0.0
    %87 = vmatprep.subr.mxu0 0.0
    %88 = vmatpush1.msra.mxu0 0.0
    %89 = vmatprep.subr.mxu0 0.0
    %90 = vmatpush1.msra.mxu0 0.0
    %91 = vmatprep.subr.mxu0 0.0
    %92 = vmatpush1.msra.mxu0 0.0
    %93 = vmatprep.subr.mxu0 0.0
    %94 = vmatpush1.msra.mxu0 0.0
    %95 = vmatprep.subr.mxu0 0.0
    %96 = vmatpush1.msra.mxu0 0.0
    %97 = vmatprep.subr.mxu0 0.0
    %98 = vmatpush1.msra.mxu0 0.0
    %99 = vmatprep.subr.mxu0 0.0
    %100 = vmatpush1.msra.mxu0 0.0
    %101 = vmatprep.subr.mxu0 0.0
    %102 = vmatpush1.msra.mxu0 0.0
    %103 = vmatprep.subr.mxu0 0.0
    %104 = vmatpush1.msra.mxu0 0.0
    %105 = vmatprep.subr.mxu0 0.0
    %106 = vmatpush1.msra.mxu0 0.0
    %107 = vmatprep.subr.mxu0 0.0
    %108 = vmatpush1.msra.mxu0 0.0
    %109 = vmatprep.subr.mxu0 0.0
    %110 = vmatpush1.msra.mxu0 0.0
    %111 = vmatprep.subr.mxu0 0.0
    %112 = vmatpush1.msra.mxu0 0.0
    %113 = vmatprep.subr.mxu0 0.0
    %114 = vmatpush1.msra.mxu0 0.0
    %115 = vmatprep.subr.mxu0 0.0
    %116 = vmatpush1.msra.mxu0 0.0
    %117 = vmatprep.subr.mxu0 0.0
    %118 = vmatpush1.msra.mxu0 0.0
    %119 = vmatprep.subr.mxu0 0.0
    %120 = vmatpush1.msra.mxu0 0.0
    %121 = vmatprep.subr.mxu0 0.0
    %122 = vmatpush1.msra.mxu0 0.0
    %123 = vmatprep.subr.mxu0 0.0
    %124 = vmatpush1.msra.mxu0 0.0
    %125 = vmatprep.subr.mxu0 0.0
    %126 = vmatpush1.msra.mxu0 0.0
    %127 = vmatprep.mubr.f32.mxu0 0.0
    %128 = vmatmul.mubr.f32.gmra.mrb[0].mxu0 %v58
    %v129 = vpop.f32.mrb[0].mxu0
    %v130 = vadd.f32 %v55, %v129
    %v131 = vpop.f32.mrb[0].mxu0
    %132 = vmatprep.mubr.f32.mxu0 0.0
    %133 = vmatmul.mubr.f32.gmra.mrb[0].mxu0 %v61
    %v134 = vpop.f32.mrb[0].mxu0
    %v135 = vadd.f32 %v55, %v134
    %v136 = vpop.f32.mrb[0].mxu0
    %137 = vdwg.mxu0
    %140 = vrot.lane.b32.xlu0 %v130, 96
    %v141 = vpop.permute.xlu0 %140
    %142 = vrot.lane.b32.xlu0 %v135, 96
    %v143 = vpop.permute.xlu0 %142
    %vm144 = vcmask 64512
    %v145 = vsel %vm144, %v130, 0
    %v147 = vsel %vm144, %v135, 0
    %v149 = vsel %vm144, %v141, 0
    %v151 = vsel %vm144, %v143, 0
    %153 = vmatprep.subr.mxu0 0.0
    %154 = vmatpush1.xpose.msra.mxu0 %v149
    %155 = vmatprep.subr.mxu0 0.0
    %156 = vmatpush1.xpose.msra.mxu0 %v151
    %157 = vmatprep.subr.mxu0 0.0
    %158 = vmatpush1.xpose.msra.mxu0 0.0
    %159 = vmatprep.subr.mxu0 0.0
    %160 = vmatpush1.xpose.msra.mxu0 0.0
    %161 = vmatprep.subr.mxu0 0.0
    %162 = vmatpush1.xpose.msra.mxu0 0.0
    %163 = vmatprep.subr.mxu0 0.0
    %164 = vmatpush1.xpose.msra.mxu0 0.0
    %165 = vmatprep.subr.mxu0 0.0
    %166 = vmatpush1.xpose.msra.mxu0 0.0
    %167 = vmatprep.subr.mxu0 0.0
    %168 = vmatpush1.xpose.msra.mxu0 0.0
    %169 = vmatprep.subr.mxu0 0.0
    %170 = vmatpush1.xpose.msra.mxu0 0.0
    %171 = vmatprep.subr.mxu0 0.0
    %172 = vmatpush1.xpose.msra.mxu0 0.0
    %173 = vmatprep.subr.mxu0 0.0
    %174 = vmatpush1.xpose.msra.mxu0 0.0
    %175 = vmatprep.subr.mxu0 0.0
    %176 = vmatpush1.xpose.msra.mxu0 0.0
    %177 = vmatprep.subr.mxu0 0.0
    %178 = vmatpush1.xpose.msra.mxu0 0.0
    %179 = vmatprep.subr.mxu0 0.0
    %180 = vmatpush1.xpose.msra.mxu0 0.0
    %181 = vmatprep.subr.mxu0 0.0
    %182 = vmatpush1.xpose.msra.mxu0 0.0
    %183 = vmatprep.subr.mxu0 0.0
    %184 = vmatpush1.xpose.msra.mxu0 0.0
    %185 = vmatprep.subr.mxu0 0.0
    %186 = vmatpush1.xpose.msra.mxu0 0.0
    %187 = vmatprep.subr.mxu0 0.0
    %188 = vmatpush1.xpose.msra.mxu0 0.0
    %189 = vmatprep.subr.mxu0 0.0
    %190 = vmatpush1.xpose.msra.mxu0 0.0
    %191 = vmatprep.subr.mxu0 0.0
    %192 = vmatpush1.xpose.msra.mxu0 0.0
    %193 = vmatprep.subr.mxu0 0.0
    %194 = vmatpush1.xpose.msra.mxu0 0.0
    %195 = vmatprep.subr.mxu0 0.0
    %196 = vmatpush1.xpose.msra.mxu0 0.0
    %197 = vmatprep.subr.mxu0 0.0
    %198 = vmatpush1.xpose.msra.mxu0 0.0
    %199 = vmatprep.subr.mxu0 0.0
    %200 = vmatpush1.xpose.msra.mxu0 0.0
    %201 = vmatprep.subr.mxu0 0.0
    %202 = vmatpush1.xpose.msra.mxu0 0.0
    %203 = vmatprep.subr.mxu0 0.0
    %204 = vmatpush1.xpose.msra.mxu0 0.0
    %205 = vmatprep.subr.mxu0 0.0
    %206 = vmatpush1.xpose.msra.mxu0 0.0
    %207 = vmatprep.subr.mxu0 0.0
    %208 = vmatpush1.xpose.msra.mxu0 0.0
    %209 = vmatprep.subr.mxu0 0.0
    %210 = vmatpush1.xpose.msra.mxu0 0.0
    %211 = vmatprep.subr.mxu0 0.0
    %212 = vmatpush1.xpose.msra.mxu0 0.0
    %213 = vmatprep.subr.mxu0 0.0
    %214 = vmatpush1.xpose.msra.mxu0 0.0
    %215 = vmatprep.subr.mxu0 0.0
    %216 = vmatpush1.xpose.msra.mxu0 0.0
    %217 = vmatprep.mubr.f32.mxu0 0.0
    %218 = vmatmul.mubr.f32.gmra.mrb[0].mxu0 %v145
    %v219 = vpop.f32.mrb[0].mxu0
    %v220 = vadd.f32 %v50, %v219
    %v221 = vpop.f32.mrb[0].mxu0
    %222 = vmatprep.mubr.f32.mxu0 0.0
    %223 = vmatmul.mubr.f32.gmra.mrb[0].mxu0 %v147
    %v224 = vpop.f32.mrb[0].mxu0
    %v225 = vadd.f32 %v51, %v224
    %v226 = vpop.f32.mrb[0].mxu0
    %227 = vdwg.mxu0
    %vm228 = vcmask 130048
    %v229 = vsel %vm228, %v220, -inf
    %230 = vmax.xlane.f32.xlu0 %v229
    %v231 = vpop.xlane.xlu0 %230
    %v232 = vsel %vm228, %v225, -inf
    %233 = vmax.xlane.f32.xlu0 %v232
    %v234 = vpop.xlane.xlu0 %233
    %v235 = vsub.f32 %v220, %v231
    %v236 = vsub.f32 %v225, %v234
    %v237 = vmul.f32 %v235, 1.442695
    %v238 = vpow.pop %v237
    %v239 = vmul.f32 %v236, 1.442695
    %v240 = vpow.pop %v239
    %v241 = vsel %vm228, %v238, 0.0
    %242 = vadd.xlane.f32.xlu0 %v241
    %v243 = vpop.xlane.xlu0 %242
    %v244 = vsel %vm228, %v240, 0.0
    %245 = vadd.xlane.f32.xlu0 %v244
    %v246 = vpop.xlane.xlu0 %245
    %v247 = vrcp.pop %v243
    %v248 = vmul.f32 %v238, %v247
    %v249 = vrcp.pop %v246
    %v250 = vmul.f32 %v240, %v249
    %251 = vrot.lane.b32.xlu0 %v130, 64
    %v252 = vpop.permute.xlu0 %251
    %253 = vrot.lane.b32.xlu0 %v135, 64
    %v254 = vpop.permute.xlu0 %253
    %v258 = vsel %vm228, %v248, 0
    %v261 = vsel %vm228, %v250, 0
    %263 = vmatprep.subr.mxu0 0.0
    %264 = vmatpush1.msra.mxu0 %v252
    %265 = vmatprep.subr.mxu0 0.0
    %266 = vmatpush1.msra.mxu0 %v254
    %267 = vmatprep.subr.mxu0 0.0
    %268 = vmatpush1.msra.mxu0 0.0
    %269 = vmatprep.subr.mxu0 0.0
    %270 = vmatpush1.msra.mxu0 0.0
    %271 = vmatprep.subr.mxu0 0.0
    %272 = vmatpush1.msra.mxu0 0.0
    %273 = vmatprep.subr.mxu0 0.0
    %274 = vmatpush1.msra.mxu0 0.0
    %275 = vmatprep.subr.mxu0 0.0
    %276 = vmatpush1.msra.mxu0 0.0
    %277 = vmatprep.subr.mxu0 0.0
    %278 = vmatpush1.msra.mxu0 0.0
    %279 = vmatprep.subr.mxu0 0.0
    %280 = vmatpush1.msra.mxu0 0.0
    %281 = vmatprep.subr.mxu0 0.0
    %282 = vmatpush1.msra.mxu0 0.0
    %283 = vmatprep.subr.mxu0 0.0
    %284 = vmatpush1.msra.mxu0 0.0
    %285 = vmatprep.subr.mxu0 0.0
    %286 = vmatpush1.msra.mxu0 0.0
    %287 = vmatprep.subr.mxu0 0.0
    %288 = vmatpush1.msra.mxu0 0.0
    %289 = vmatprep.subr.mxu0 0.0
    %290 = vmatpush1.msra.mxu0 0.0
    %291 = vmatprep.subr.mxu0 0.0
    %292 = vmatpush1.msra.mxu0 0.0
    %293 = vmatprep.subr.mxu0 0.0
    %294 = vmatpush1.msra.mxu0 0.0
    %295 = vmatprep.subr.mxu0 0.0
    %296 = vmatpush1.msra.mxu0 0.0
    %297 = vmatprep.subr.mxu0 0.0
    %298 = vmatpush1.msra.mxu0 0.0
    %299 = vmatprep.subr.mxu0 0.0
    %300 = vmatpush1.msra.mxu0 0.0
    %301 = vmatprep.subr.mxu0 0.0
    %302 = vmatpush1.msra.mxu0 0.0
    %303 = vmatprep.subr.mxu0 0.0
    %304 = vmatpush1.msra.mxu0 0.0
    %305 = vmatprep.subr.mxu0 0.0
    %306 = vmatpush1.msra.mxu0 0.0
    %307 = vmatprep.subr.mxu0 0.0
    %308 = vmatpush1.msra.mxu0 0.0
    %309 = vmatprep.subr.mxu0 0.0
    %310 = vmatpush1.msra.mxu0 0.0
    %311 = vmatprep.subr.mxu0 0.0
    %312 = vmatpush1.msra.mxu0 0.0
    %313 = vmatprep.subr.mxu0 0.0
    %314 = vmatpush1.msra.mxu0 0.0
    %315 = vmatprep.subr.mxu0 0.0
    %316 = vmatpush1.msra.mxu0 0.0
    %317 = vmatprep.subr.mxu0 0.0
    %318 = vmatpush1.msra.mxu0 0.0
    %319 = vmatprep.subr.mxu0 0.0
    %320 = vmatpush1.msra.mxu0 0.0
    %321 = vmatprep.subr.mxu0 0.0
    %322 = vmatpush1.msra.mxu0 0.0
    %323 = vmatprep.subr.mxu0 0.0
    %324 = vmatpush1.msra.mxu0 0.0
    %325 = vmatprep.subr.mxu0 0.0
    %326 = vmatpush1.msra.mxu0 0.0
    %327 = vmatprep.mubr.f32.mxu0 0.0
    %328 = vmatmul.mubr.f32.gmra.mrb[0].mxu0 %v258
    %v329 = vpop.f32.mrb[0].mxu0
    %v330 = vadd.f32 0.0, %v329
    %v331 = vpop.f32.mrb[0].mxu0
    %332 = vmatprep.mubr.f32.mxu0 0.0
    %333 = vmatmul.mubr.f32.gmra.mrb[0].mxu0 %v261
    %v334 = vpop.f32.mrb[0].mxu0
    %v335 = vadd.f32 0.0, %v334
    %v336 = vpop.f32.mrb[0].mxu0
    %337 = vdwg.mxu0
    %338 = vrot.lane.b32.xlu0 %v130, 120
    %v339 = vpop.permute.xlu0 %338
    %340 = vrot.lane.b32.xlu0 %v135, 120
    %v341 = vpop.permute.xlu0 %340
    %342 = vrot.lane.b32.xlu0 %v130, 88
    %v343 = vpop.permute.xlu0 %342
    %344 = vrot.lane.b32.xlu0 %v135, 88
    %v345 = vpop.permute.xlu0 %344
    %v346 = vsel %vm144, %v339, 0
    %v348 = vsel %vm144, %v341, 0
    %v350 = vsel %vm144, %v343, 0
    %v352 = vsel %vm144, %v345, 0
    %354 = vmatprep.subr.mxu0 0.0
    %355 = vmatpush1.xpose.msra.mxu0 %v350
    %356 = vmatprep.subr.mxu0 0.0
    %357 = vmatpush1.xpose.msra.mxu0 %v352
    %358 = vmatprep.subr.mxu0 0.0
    %359 = vmatpush1.xpose.msra.mxu0 0.0
    %360 = vmatprep.subr.mxu0 0.0
    %361 = vmatpush1.xpose.msra.mxu0 0.0
    %362 = vmatprep.subr.mxu0 0.0
    %363 = vmatpush1.xpose.msra.mxu0 0.0
    %364 = vmatprep.subr.mxu0 0.0
    %365 = vmatpush1.xpose.msra.mxu0 0.0
    %366 = vmatprep.subr.mxu0 0.0
    %367 = vmatpush1.xpose.msra.mxu0 0.0
    %368 = vmatprep.subr.mxu0 0.0
    %369 = vmatpush1.xpose.msra.mxu0 0.0
    %370 = vmatprep.subr.mxu0 0.0
    %371 = vmatpush1.xpose.msra.mxu0 0.0
    %372 = vmatprep.subr.mxu0 0.0
    %373 = vmatpush1.xpose.msra.mxu0 0.0
    %374 = vmatprep.subr.mxu0 0.0
    %375 = vmatpush1.xpose.msra.mxu0 0.0
    %376 = vmatprep.subr.mxu0 0.0
    %377 = vmatpush1.xpose.msra.mxu0 0.0
    %378 = vmatprep.subr.mxu0 0.0
    %379 = vmatpush1.xpose.msra.mxu0 0.0
    %380 = vmatprep.subr.mxu0 0.0
    %381 = vmatpush1.xpose.msra.mxu0 0.0
    %382 = vmatprep.subr.mxu0 0.0
    %383 = vmatpush1.xpose.msra.mxu0 0.0
    %384 = vmatprep.subr.mxu0 0.0
    %385 = vmatpush1.xpose.msra.mxu0 0.0
    %386 = vmatprep.subr.mxu0 0.0
    %387 = vmatpush1.xpose.msra.mxu0 0.0
    %388 = vmatprep.subr.mxu0 0.0
    %389 = vmatpush1.xpose.msra.mxu0 0.0
    %390 = vmatprep.subr.mxu0 0.0
    %391 = vmatpush1.xpose.msra.mxu0 0.0
    %392 = vmatprep.subr.mxu0 0.0
    %393 = vmatpush1.xpose.msra.mxu0 0.0
    %394 = vmatprep.subr.mxu0 0.0
    %395 = vmatpush1.xpose.msra.mxu0 0.0
    %396 = vmatprep.subr.mxu0 0.0
    %397 = vmatpush1.xpose.msra.mxu0 0.0
    %398 = vmatprep.subr.mxu0 0.0
    %399 = vmatpush1.xpose.msra.mxu0 0.0
    %400 = vmatprep.subr.mxu0 0.0
    %401 = vmatpush1.xpose.msra.mxu0 0.0
    %402 = vmatprep.subr.mxu0 0.0
    %403 = vmatpush1.xpose.msra.mxu0 0.0
    %404 = vmatprep.subr.mxu0 0.0
    %405 = vmatpush1.xpose.msra.mxu0 0.0
    %406 = vmatprep.subr.mxu0 0.0
    %407 = vmatpush1.xpose.msra.mxu0 0.0
    %408 = vmatprep.subr.mxu0 0.0
    %409 = vmatpush1.xpose.msra.mxu0 0.0
    %410 = vmatprep.subr.mxu0 0.0
    %411 = vmatpush1.xpose.msra.mxu0 0.0
    %412 = vmatprep.subr.mxu0 0.0
    %413 = vmatpush1.xpose.msra.mxu0 0.0
    %414 = vmatprep.subr.mxu0 0.0
    %415 = vmatpush1.xpose.msra.mxu0 0.0
    %416 = vmatprep.subr.mxu0 0.0
    %417 = vmatpush1.xpose.msra.mxu0 0.0
    %418 = vmatprep.mubr.f32.mxu0 0.0
    %419 = vmatmul.mubr.f32.gmra.mrb[0].mxu0 %v346
    %v420 = vpop.f32.mrb[0].mxu0
    %v421 = vadd.f32 %v50, %v420
    %v422 = vpop.f32.mrb[0].mxu0
    %423 = vmatprep.mubr.f32.mxu0 0.0
    %424 = vmatmul.mubr.f32.gmra.mrb[0].mxu0 %v348
    %v425 = vpop.f32.mrb[0].mxu0
    %v426 = vadd.f32 %v51, %v425
    %v427 = vpop.f32.mrb[0].mxu0
    %428 = vdwg.mxu0
    %v429 = vsel %vm228, %v421, -inf
    %430 = vmax.xlane.f32.xlu0 %v429
    %v431 = vpop.xlane.xlu0 %430
    %v432 = vsel %vm228, %v426, -inf
    %433 = vmax.xlane.f32.xlu0 %v432
    %v434 = vpop.xlane.xlu0 %433
    %v435 = vsub.f32 %v421, %v431
    %v436 = vsub.f32 %v426, %v434
    %v437 = vmul.f32 %v435, 1.442695
    %v438 = vpow.pop %v437
    %v439 = vmul.f32 %v436, 1.442695
    %v440 = vpow.pop %v439
    %v441 = vsel %vm228, %v438, 0.0
    %442 = vadd.xlane.f32.xlu0 %v441
    %v443 = vpop.xlane.xlu0 %442
    %v444 = vsel %vm228, %v440, 0.0
    %445 = vadd.xlane.f32.xlu0 %v444
    %v446 = vpop.xlane.xlu0 %445
    %v447 = vrcp.pop %v443
    %v448 = vmul.f32 %v438, %v447
    %v449 = vrcp.pop %v446
    %v450 = vmul.f32 %v440, %v449
    %451 = vrot.lane.b32.xlu0 %v130, 56
    %v452 = vpop.permute.xlu0 %451
    %453 = vrot.lane.b32.xlu0 %v135, 56
    %v454 = vpop.permute.xlu0 %453
    %v458 = vsel %vm228, %v448, 0
    %v461 = vsel %vm228, %v450, 0
    %463 = vmatprep.subr.mxu0 0.0
    %464 = vmatpush1.msra.mxu0 %v452
    %465 = vmatprep.subr.mxu0 0.0
    %466 = vmatpush1.msra.mxu0 %v454
    %467 = vmatprep.subr.mxu0 0.0
    %468 = vmatpush1.msra.mxu0 0.0
    %469 = vmatprep.subr.mxu0 0.0
    %470 = vmatpush1.msra.mxu0 0.0
    %471 = vmatprep.subr.mxu0 0.0
    %472 = vmatpush1.msra.mxu0 0.0
    %473 = vmatprep.subr.mxu0 0.0
    %474 = vmatpush1.msra.mxu0 0.0
    %475 = vmatprep.subr.mxu0 0.0
    %476 = vmatpush1.msra.mxu0 0.0
    %477 = vmatprep.subr.mxu0 0.0
    %478 = vmatpush1.msra.mxu0 0.0
    %479 = vmatprep.subr.mxu0 0.0
    %480 = vmatpush1.msra.mxu0 0.0
    %481 = vmatprep.subr.mxu0 0.0
    %482 = vmatpush1.msra.mxu0 0.0
    %483 = vmatprep.subr.mxu0 0.0
    %484 = vmatpush1.msra.mxu0 0.0
    %485 = vmatprep.subr.mxu0 0.0
    %486 = vmatpush1.msra.mxu0 0.0
    %487 = vmatprep.subr.mxu0 0.0
    %488 = vmatpush1.msra.mxu0 0.0
    %489 = vmatprep.subr.mxu0 0.0
    %490 = vmatpush1.msra.mxu0 0.0
    %491 = vmatprep.subr.mxu0 0.0
    %492 = vmatpush1.msra.mxu0 0.0
    %493 = vmatprep.subr.mxu0 0.0
    %494 = vmatpush1.msra.mxu0 0.0
    %495 = vmatprep.subr.mxu0 0.0
    %496 = vmatpush1.msra.mxu0 0.0
    %497 = vmatprep.subr.mxu0 0.0
    %498 = vmatpush1.msra.mxu0 0.0
    %499 = vmatprep.subr.mxu0 0.0
    %500 = vmatpush1.msra.mxu0 0.0
    %501 = vmatprep.subr.mxu0 0.0
    %502 = vmatpush1.msra.mxu0 0.0
    %503 = vmatprep.subr.mxu0 0.0
    %504 = vmatpush1.msra.mxu0 0.0
    %505 = vmatprep.subr.mxu0 0.0
    %506 = vmatpush1.msra.mxu0 0.0
    %507 = vmatprep.subr.mxu0 0.0
    %508 = vmatpush1.msra.mxu0 0.0
    %509 = vmatprep.subr.mxu0 0.0
    %510 = vmatpush1.msra.mxu0 0.0
    %511 = vmatprep.subr.mxu0 0.0
    %512 = vmatpush1.msra.mxu0 0.0
    %513 = vmatprep.subr.mxu0 0.0
    %514 = vmatpush1.msra.mxu0 0.0
    %515 = vmatprep.subr.mxu0 0.0
    %516 = vmatpush1.msra.mxu0 0.0
    %517 = vmatprep.subr.mxu0 0.0
    %518 = vmatpush1.msra.mxu0 0.0
    %519 = vmatprep.subr.mxu0 0.0
    %520 = vmatpush1.msra.mxu0 0.0
    %521 = vmatprep.subr.mxu0 0.0
    %522 = vmatpush1.msra.mxu0 0.0
    %523 = vmatprep.subr.mxu0 0.0
    %524 = vmatpush1.msra.mxu0 0.0
    %525 = vmatprep.subr.mxu0 0.0
    %526 = vmatpush1.msra.mxu0 0.0
    %527 = vmatprep.mubr.f32.mxu0 0.0
    %528 = vmatmul.mubr.f32.gmra.mrb[0].mxu0 %v458
    %v529 = vpop.f32.mrb[0].mxu0
    %v530 = vadd.f32 0.0, %v529
    %v531 = vpop.f32.mrb[0].mxu0
    %532 = vmatprep.mubr.f32.mxu0 0.0
    %533 = vmatmul.mubr.f32.gmra.mrb[0].mxu0 %v461
    %v534 = vpop.f32.mrb[0].mxu0
    %v535 = vadd.f32 0.0, %v534
    %v536 = vpop.f32.mrb[0].mxu0
    %537 = vdwg.mxu0
    %538 = vrot.lane.b32.xlu0 %v130, 112
    %v539 = vpop.permute.xlu0 %538
    %540 = vrot.lane.b32.xlu0 %v135, 112
    %v541 = vpop.permute.xlu0 %540
    %542 = vrot.lane.b32.xlu0 %v130, 80
    %v543 = vpop.permute.xlu0 %542
    %544 = vrot.lane.b32.xlu0 %v135, 80
    %v545 = vpop.permute.xlu0 %544
    %v546 = vsel %vm144, %v539, 0
    %v548 = vsel %vm144, %v541, 0
    %v550 = vsel %vm144, %v543, 0
    %v552 = vsel %vm144, %v545, 0
    %554 = vmatprep.subr.mxu0 0.0
    %555 = vmatpush1.xpose.msra.mxu0 %v550
    %556 = vmatprep.subr.mxu0 0.0
    %557 = vmatpush1.xpose.msra.mxu0 %v552
    %558 = vmatprep.subr.mxu0 0.0
    %559 = vmatpush1.xpose.msra.mxu0 0.0
    %560 = vmatprep.subr.mxu0 0.0
    %561 = vmatpush1.xpose.msra.mxu0 0.0
    %562 = vmatprep.subr.mxu0 0.0
    %563 = vmatpush1.xpose.msra.mxu0 0.0
    %564 = vmatprep.subr.mxu0 0.0
    %565 = vmatpush1.xpose.msra.mxu0 0.0
    %566 = vmatprep.subr.mxu0 0.0
    %567 = vmatpush1.xpose.msra.mxu0 0.0
    %568 = vmatprep.subr.mxu0 0.0
    %569 = vmatpush1.xpose.msra.mxu0 0.0
    %570 = vmatprep.subr.mxu0 0.0
    %571 = vmatpush1.xpose.msra.mxu0 0.0
    %572 = vmatprep.subr.mxu0 0.0
    %573 = vmatpush1.xpose.msra.mxu0 0.0
    %574 = vmatprep.subr.mxu0 0.0
    %575 = vmatpush1.xpose.msra.mxu0 0.0
    %576 = vmatprep.subr.mxu0 0.0
    %577 = vmatpush1.xpose.msra.mxu0 0.0
    %578 = vmatprep.subr.mxu0 0.0
    %579 = vmatpush1.xpose.msra.mxu0 0.0
    %580 = vmatprep.subr.mxu0 0.0
    %581 = vmatpush1.xpose.msra.mxu0 0.0
    %582 = vmatprep.subr.mxu0 0.0
    %583 = vmatpush1.xpose.msra.mxu0 0.0
    %584 = vmatprep.subr.mxu0 0.0
    %585 = vmatpush1.xpose.msra.mxu0 0.0
    %586 = vmatprep.subr.mxu0 0.0
    %587 = vmatpush1.xpose.msra.mxu0 0.0
    %588 = vmatprep.subr.mxu0 0.0
    %589 = vmatpush1.xpose.msra.mxu0 0.0
    %590 = vmatprep.subr.mxu0 0.0
    %591 = vmatpush1.xpose.msra.mxu0 0.0
    %592 = vmatprep.subr.mxu0 0.0
    %593 = vmatpush1.xpose.msra.mxu0 0.0
    %594 = vmatprep.subr.mxu0 0.0
    %595 = vmatpush1.xpose.msra.mxu0 0.0
    %596 = vmatprep.subr.mxu0 0.0
    %597 = vmatpush1.xpose.msra.mxu0 0.0
    %598 = vmatprep.subr.mxu0 0.0
    %599 = vmatpush1.xpose.msra.mxu0 0.0
    %600 = vmatprep.subr.mxu0 0.0
    %601 = vmatpush1.xpose.msra.mxu0 0.0
    %602 = vmatprep.subr.mxu0 0.0
    %603 = vmatpush1.xpose.msra.mxu0 0.0
    %604 = vmatprep.subr.mxu0 0.0
    %605 = vmatpush1.xpose.msra.mxu0 0.0
    %606 = vmatprep.subr.mxu0 0.0
    %607 = vmatpush1.xpose.msra.mxu0 0.0
    %608 = vmatprep.subr.mxu0 0.0
    %609 = vmatpush1.xpose.msra.mxu0 0.0
    %610 = vmatprep.subr.mxu0 0.0
    %611 = vmatpush1.xpose.msra.mxu0 0.0
    %612 = vmatprep.subr.mxu0 0.0
    %613 = vmatpush1.xpose.msra.mxu0 0.0
    %614 = vmatprep.subr.mxu0 0.0
    %615 = vmatpush1.xpose.msra.mxu0 0.0
    %616 = vmatprep.subr.mxu0 0.0
    %617 = vmatpush1.xpose.msra.mxu0 0.0
    %618 = vmatprep.mubr.f32.mxu0 0.0
    %619 = vmatmul.mubr.f32.gmra.mrb[0].mxu0 %v546
    %v620 = vpop.f32.mrb[0].mxu0
    %v621 = vadd.f32 %v50, %v620
    %v622 = vpop.f32.mrb[0].mxu0
    %623 = vmatprep.mubr.f32.mxu0 0.0
    %624 = vmatmul.mubr.f32.gmra.mrb[0].mxu0 %v548
    %v625 = vpop.f32.mrb[0].mxu0
    %v626 = vadd.f32 %v51, %v625
    %v627 = vpop.f32.mrb[0].mxu0
    %628 = vdwg.mxu0
    %v629 = vsel %vm228, %v621, -inf
    %630 = vmax.xlane.f32.xlu0 %v629
    %v631 = vpop.xlane.xlu0 %630
    %v632 = vsel %vm228, %v626, -inf
    %633 = vmax.xlane.f32.xlu0 %v632
    %v634 = vpop.xlane.xlu0 %633
    %v635 = vsub.f32 %v621, %v631
    %v636 = vsub.f32 %v626, %v634
    %v637 = vmul.f32 %v635, 1.442695
    %v638 = vpow.pop %v637
    %v639 = vmul.f32 %v636, 1.442695
    %v640 = vpow.pop %v639
    %v641 = vsel %vm228, %v638, 0.0
    %642 = vadd.xlane.f32.xlu0 %v641
    %v643 = vpop.xlane.xlu0 %642
    %v644 = vsel %vm228, %v640, 0.0
    %645 = vadd.xlane.f32.xlu0 %v644
    %v646 = vpop.xlane.xlu0 %645
    %v647 = vrcp.pop %v643
    %v648 = vmul.f32 %v638, %v647
    %v649 = vrcp.pop %v646
    %v650 = vmul.f32 %v640, %v649
    %651 = vrot.lane.b32.xlu0 %v130, 48
    %v652 = vpop.permute.xlu0 %651
    %653 = vrot.lane.b32.xlu0 %v135, 48
    %v654 = vpop.permute.xlu0 %653
    %v658 = vsel %vm228, %v648, 0
    %v661 = vsel %vm228, %v650, 0
    %663 = vmatprep.subr.mxu0 0.0
    %664 = vmatpush1.msra.mxu0 %v652
    %665 = vmatprep.subr.mxu0 0.0
    %666 = vmatpush1.msra.mxu0 %v654
    %667 = vmatprep.subr.mxu0 0.0
    %668 = vmatpush1.msra.mxu0 0.0
    %669 = vmatprep.subr.mxu0 0.0
    %670 = vmatpush1.msra.mxu0 0.0
    %671 = vmatprep.subr.mxu0 0.0
    %672 = vmatpush1.msra.mxu0 0.0
    %673 = vmatprep.subr.mxu0 0.0
    %674 = vmatpush1.msra.mxu0 0.0
    %675 = vmatprep.subr.mxu0 0.0
    %676 = vmatpush1.msra.mxu0 0.0
    %677 = vmatprep.subr.mxu0 0.0
    %678 = vmatpush1.msra.mxu0 0.0
    %679 = vmatprep.subr.mxu0 0.0
    %680 = vmatpush1.msra.mxu0 0.0
    %681 = vmatprep.subr.mxu0 0.0
    %682 = vmatpush1.msra.mxu0 0.0
    %683 = vmatprep.subr.mxu0 0.0
    %684 = vmatpush1.msra.mxu0 0.0
    %685 = vmatprep.subr.mxu0 0.0
    %686 = vmatpush1.msra.mxu0 0.0
    %687 = vmatprep.subr.mxu0 0.0
    %688 = vmatpush1.msra.mxu0 0.0
    %689 = vmatprep.subr.mxu0 0.0
    %690 = vmatpush1.msra.mxu0 0.0
    %691 = vmatprep.subr.mxu0 0.0
    %692 = vmatpush1.msra.mxu0 0.0
    %693 = vmatprep.subr.mxu0 0.0
    %694 = vmatpush1.msra.mxu0 0.0
    %695 = vmatprep.subr.mxu0 0.0
    %696 = vmatpush1.msra.mxu0 0.0
    %697 = vmatprep.subr.mxu0 0.0
    %698 = vmatpush1.msra.mxu0 0.0
    %699 = vmatprep.subr.mxu0 0.0
    %700 = vmatpush1.msra.mxu0 0.0
    %701 = vmatprep.subr.mxu0 0.0
    %702 = vmatpush1.msra.mxu0 0.0
    %703 = vmatprep.subr.mxu0 0.0
    %704 = vmatpush1.msra.mxu0 0.0
    %705 = vmatprep.subr.mxu0 0.0
    %706 = vmatpush1.msra.mxu0 0.0
    %707 = vmatprep.subr.mxu0 0.0
    %708 = vmatpush1.msra.mxu0 0.0
    %709 = vmatprep.subr.mxu0 0.0
    %710 = vmatpush1.msra.mxu0 0.0
    %711 = vmatprep.subr.mxu0 0.0
    %712 = vmatpush1.msra.mxu0 0.0
    %713 = vmatprep.subr.mxu0 0.0
    %714 = vmatpush1.msra.mxu0 0.0
    %715 = vmatprep.subr.mxu0 0.0
    %716 = vmatpush1.msra.mxu0 0.0
    %717 = vmatprep.subr.mxu0 0.0
    %718 = vmatpush1.msra.mxu0 0.0
    %719 = vmatprep.subr.mxu0 0.0
    %720 = vmatpush1.msra.mxu0 0.0
    %721 = vmatprep.subr.mxu0 0.0
    %722 = vmatpush1.msra.mxu0 0.0
    %723 = vmatprep.subr.mxu0 0.0
    %724 = vmatpush1.msra.mxu0 0.0
    %725 = vmatprep.subr.mxu0 0.0
    %726 = vmatpush1.msra.mxu0 0.0
    %727 = vmatprep.mubr.f32.mxu0 0.0
    %728 = vmatmul.mubr.f32.gmra.mrb[0].mxu0 %v658
    %v729 = vpop.f32.mrb[0].mxu0
    %v730 = vadd.f32 0.0, %v729
    %v731 = vpop.f32.mrb[0].mxu0
    %732 = vmatprep.mubr.f32.mxu0 0.0
    %733 = vmatmul.mubr.f32.gmra.mrb[0].mxu0 %v661
    %v734 = vpop.f32.mrb[0].mxu0
    %v735 = vadd.f32 0.0, %v734
    %v736 = vpop.f32.mrb[0].mxu0
    %737 = vdwg.mxu0
    %738 = vrot.lane.b32.xlu0 %v130, 104
    %v739 = vpop.permute.xlu0 %738
    %740 = vrot.lane.b32.xlu0 %v135, 104
    %v741 = vpop.permute.xlu0 %740
    %742 = vrot.lane.b32.xlu0 %v130, 72
    %v743 = vpop.permute.xlu0 %742
    %744 = vrot.lane.b32.xlu0 %v135, 72
    %v745 = vpop.permute.xlu0 %744
    %v746 = vsel %vm144, %v739, 0
    %v748 = vsel %vm144, %v741, 0
    %v750 = vsel %vm144, %v743, 0
    %v752 = vsel %vm144, %v745, 0
    %754 = vmatprep.subr.mxu0 0.0
    %755 = vmatpush1.xpose.msra.mxu0 %v750
    %756 = vmatprep.subr.mxu0 0.0
    %757 = vmatpush1.xpose.msra.mxu0 %v752
    %758 = vmatprep.subr.mxu0 0.0
    %759 = vmatpush1.xpose.msra.mxu0 0.0
    %760 = vmatprep.subr.mxu0 0.0
    %761 = vmatpush1.xpose.msra.mxu0 0.0
    %762 = vmatprep.subr.mxu0 0.0
    %763 = vmatpush1.xpose.msra.mxu0 0.0
    %764 = vmatprep.subr.mxu0 0.0
    %765 = vmatpush1.xpose.msra.mxu0 0.0
    %766 = vmatprep.subr.mxu0 0.0
    %767 = vmatpush1.xpose.msra.mxu0 0.0
    %768 = vmatprep.subr.mxu0 0.0
    %769 = vmatpush1.xpose.msra.mxu0 0.0
    %770 = vmatprep.subr.mxu0 0.0
    %771 = vmatpush1.xpose.msra.mxu0 0.0
    %772 = vmatprep.subr.mxu0 0.0
    %773 = vmatpush1.xpose.msra.mxu0 0.0
    %774 = vmatprep.subr.mxu0 0.0
    %775 = vmatpush1.xpose.msra.mxu0 0.0
    %776 = vmatprep.subr.mxu0 0.0
    %777 = vmatpush1.xpose.msra.mxu0 0.0
    %778 = vmatprep.subr.mxu0 0.0
    %779 = vmatpush1.xpose.msra.mxu0 0.0
    %780 = vmatprep.subr.mxu0 0.0
    %781 = vmatpush1.xpose.msra.mxu0 0.0
    %782 = vmatprep.subr.mxu0 0.0
    %783 = vmatpush1.xpose.msra.mxu0 0.0
    %784 = vmatprep.subr.mxu0 0.0
    %785 = vmatpush1.xpose.msra.mxu0 0.0
    %786 = vmatprep.subr.mxu0 0.0
    %787 = vmatpush1.xpose.msra.mxu0 0.0
    %788 = vmatprep.subr.mxu0 0.0
    %789 = vmatpush1.xpose.msra.mxu0 0.0
    %790 = vmatprep.subr.mxu0 0.0
    %791 = vmatpush1.xpose.msra.mxu0 0.0
    %792 = vmatprep.subr.mxu0 0.0
    %793 = vmatpush1.xpose.msra.mxu0 0.0
    %794 = vmatprep.subr.mxu0 0.0
    %795 = vmatpush1.xpose.msra.mxu0 0.0
    %796 = vmatprep.subr.mxu0 0.0
    %797 = vmatpush1.xpose.msra.mxu0 0.0
    %798 = vmatprep.subr.mxu0 0.0
    %799 = vmatpush1.xpose.msra.mxu0 0.0
    %800 = vmatprep.subr.mxu0 0.0
    %801 = vmatpush1.xpose.msra.mxu0 0.0
    %802 = vmatprep.subr.mxu0 0.0
    %803 = vmatpush1.xpose.msra.mxu0 0.0
    %804 = vmatprep.subr.mxu0 0.0
    %805 = vmatpush1.xpose.msra.mxu0 0.0
    %806 = vmatprep.subr.mxu0 0.0
    %807 = vmatpush1.xpose.msra.mxu0 0.0
    %808 = vmatprep.subr.mxu0 0.0
    %809 = vmatpush1.xpose.msra.mxu0 0.0
    %810 = vmatprep.subr.mxu0 0.0
    %811 = vmatpush1.xpose.msra.mxu0 0.0
    %812 = vmatprep.subr.mxu0 0.0
    %813 = vmatpush1.xpose.msra.mxu0 0.0
    %814 = vmatprep.subr.mxu0 0.0
    %815 = vmatpush1.xpose.msra.mxu0 0.0
    %816 = vmatprep.subr.mxu0 0.0
    %817 = vmatpush1.xpose.msra.mxu0 0.0
    %818 = vmatprep.mubr.f32.mxu0 0.0
    %819 = vmatmul.mubr.f32.gmra.mrb[0].mxu0 %v746
    %v820 = vpop.f32.mrb[0].mxu0
    %v821 = vadd.f32 %v50, %v820
    %v822 = vpop.f32.mrb[0].mxu0
    %823 = vmatprep.mubr.f32.mxu0 0.0
    %824 = vmatmul.mubr.f32.gmra.mrb[0].mxu0 %v748
    %v825 = vpop.f32.mrb[0].mxu0
    %v826 = vadd.f32 %v51, %v825
    %v827 = vpop.f32.mrb[0].mxu0
    %828 = vdwg.mxu0
    %v829 = vsel %vm228, %v821, -inf
    %830 = vmax.xlane.f32.xlu0 %v829
    %v831 = vpop.xlane.xlu0 %830
    %v832 = vsel %vm228, %v826, -inf
    %833 = vmax.xlane.f32.xlu0 %v832
    %v834 = vpop.xlane.xlu0 %833
    %v835 = vsub.f32 %v821, %v831
    %v836 = vsub.f32 %v826, %v834
    %v837 = vmul.f32 %v835, 1.442695
    %v838 = vpow.pop %v837
    %v839 = vmul.f32 %v836, 1.442695
    %v840 = vpow.pop %v839
    %v841 = vsel %vm228, %v838, 0.0
    %842 = vadd.xlane.f32.xlu0 %v841
    %v843 = vpop.xlane.xlu0 %842
    %v844 = vsel %vm228, %v840, 0.0
    %845 = vadd.xlane.f32.xlu0 %v844
    %v846 = vpop.xlane.xlu0 %845
    %v847 = vrcp.pop %v843
    %v848 = vmul.f32 %v838, %v847
    %v849 = vrcp.pop %v846
    %v850 = vmul.f32 %v840, %v849
    %851 = vrot.lane.b32.xlu0 %v130, 40
    %v852 = vpop.permute.xlu0 %851
    %853 = vrot.lane.b32.xlu0 %v135, 40
    %v854 = vpop.permute.xlu0 %853
    %v858 = vsel %vm228, %v848, 0
    %v861 = vsel %vm228, %v850, 0
    %863 = vmatprep.subr.mxu0 0.0
    %864 = vmatpush1.msra.mxu0 %v852
    %865 = vmatprep.subr.mxu0 0.0
    %866 = vmatpush1.msra.mxu0 %v854
    %867 = vmatprep.subr.mxu0 0.0
    %868 = vmatpush1.msra.mxu0 0.0
    %869 = vmatprep.subr.mxu0 0.0
    %870 = vmatpush1.msra.mxu0 0.0
    %871 = vmatprep.subr.mxu0 0.0
    %872 = vmatpush1.msra.mxu0 0.0
    %873 = vmatprep.subr.mxu0 0.0
    %874 = vmatpush1.msra.mxu0 0.0
    %875 = vmatprep.subr.mxu0 0.0
    %876 = vmatpush1.msra.mxu0 0.0
    %877 = vmatprep.subr.mxu0 0.0
    %878 = vmatpush1.msra.mxu0 0.0
    %879 = vmatprep.subr.mxu0 0.0
    %880 = vmatpush1.msra.mxu0 0.0
    %881 = vmatprep.subr.mxu0 0.0
    %882 = vmatpush1.msra.mxu0 0.0
    %883 = vmatprep.subr.mxu0 0.0
    %884 = vmatpush1.msra.mxu0 0.0
    %885 = vmatprep.subr.mxu0 0.0
    %886 = vmatpush1.msra.mxu0 0.0
    %887 = vmatprep.subr.mxu0 0.0
    %888 = vmatpush1.msra.mxu0 0.0
    %889 = vmatprep.subr.mxu0 0.0
    %890 = vmatpush1.msra.mxu0 0.0
    %891 = vmatprep.subr.mxu0 0.0
    %892 = vmatpush1.msra.mxu0 0.0
    %893 = vmatprep.subr.mxu0 0.0
    %894 = vmatpush1.msra.mxu0 0.0
    %895 = vmatprep.subr.mxu0 0.0
    %896 = vmatpush1.msra.mxu0 0.0
    %897 = vmatprep.subr.mxu0 0.0
    %898 = vmatpush1.msra.mxu0 0.0
    %899 = vmatprep.subr.mxu0 0.0
    %900 = vmatpush1.msra.mxu0 0.0
    %901 = vmatprep.subr.mxu0 0.0
    %902 = vmatpush1.msra.mxu0 0.0
    %903 = vmatprep.subr.mxu0 0.0
    %904 = vmatpush1.msra.mxu0 0.0
    %905 = vmatprep.subr.mxu0 0.0
    %906 = vmatpush1.msra.mxu0 0.0
    %907 = vmatprep.subr.mxu0 0.0
    %908 = vmatpush1.msra.mxu0 0.0
    %909 = vmatprep.subr.mxu0 0.0
    %910 = vmatpush1.msra.mxu0 0.0
    %911 = vmatprep.subr.mxu0 0.0
    %912 = vmatpush1.msra.mxu0 0.0
    %913 = vmatprep.subr.mxu0 0.0
    %914 = vmatpush1.msra.mxu0 0.0
    %915 = vmatprep.subr.mxu0 0.0
    %916 = vmatpush1.msra.mxu0 0.0
    %917 = vmatprep.subr.mxu0 0.0
    %918 = vmatpush1.msra.mxu0 0.0
    %919 = vmatprep.subr.mxu0 0.0
    %920 = vmatpush1.msra.mxu0 0.0
    %921 = vmatprep.subr.mxu0 0.0
    %922 = vmatpush1.msra.mxu0 0.0
    %923 = vmatprep.subr.mxu0 0.0
    %924 = vmatpush1.msra.mxu0 0.0
    %925 = vmatprep.subr.mxu0 0.0
    %926 = vmatpush1.msra.mxu0 0.0
    %927 = vmatprep.mubr.f32.mxu0 0.0
    %928 = vmatmul.mubr.f32.gmra.mrb[0].mxu0 %v858
    %v929 = vpop.f32.mrb[0].mxu0
    %v930 = vadd.f32 0.0, %v929
    %v931 = vpop.f32.mrb[0].mxu0
    %932 = vmatprep.mubr.f32.mxu0 0.0
    %933 = vmatmul.mubr.f32.gmra.mrb[0].mxu0 %v861
    %v934 = vpop.f32.mrb[0].mxu0
    %v935 = vadd.f32 0.0, %v934
    %v936 = vpop.f32.mrb[0].mxu0
    %937 = vdwg.mxu0
    %940 = vrot.lane.b32.xlu0 %v530, 8
    %v941 = vpop.permute.xlu0 %940
    %942 = vrot.lane.b32.xlu0 %v535, 8
    %v943 = vpop.permute.xlu0 %942
    %948 = vrot.lane.b32.xlu0 %v730, 16
    %v949 = vpop.permute.xlu0 %948
    %950 = vrot.lane.b32.xlu0 %v735, 16
    %v951 = vpop.permute.xlu0 %950
    %956 = vrot.lane.b32.xlu0 %v930, 24
    %v957 = vpop.permute.xlu0 %956
    %958 = vrot.lane.b32.xlu0 %v935, 24
    %v959 = vpop.permute.xlu0 %958
    %v962 = vsel %vm144, %v330, %v941
    %v963 = vsel %vm144, %v335, %v943
    %v964 = vsel %vm228, %v962, %v949
    %v965 = vsel %vm228, %v963, %v951
    %vm966 = vcmask 195584
    %v967 = vsel %vm966, %v964, %v957
    %v968 = vsel %vm966, %v965, %v959
    %v969 = vlaneseq
    %v970 = vshrl.u32 %v969, 7
    %v971 = vsub.s32 0, %v970
    %v972 = vrot.slane %v43, %v971
    %977 = vrot.lane.b32.xlu0 %v34, 32
    %v978 = vpop.permute.xlu0 %977
    %979 = vrot.lane.b32.xlu0 %v35, 32
    %v980 = vpop.permute.xlu0 %979
    %981 = vrot.lane.b32.xlu0 %v36, 32
    %v982 = vpop.permute.xlu0 %981
    %983 = vrot.lane.b32.xlu0 %v37, 32
    %v984 = vpop.permute.xlu0 %983
    %v990 = vsel %vm56, %v967, 0
    %v993 = vsel %vm56, %v968, 0
    %995 = vmatprep.subr.mxu0 0.0
    %996 = vmatpush1.msra.mxu0 %v978
    %997 = vmatprep.subr.mxu0 0.0
    %998 = vmatpush1.msra.mxu0 %v980
    %999 = vmatprep.subr.mxu0 0.0
    %1000 = vmatpush1.msra.mxu0 %v982
    %1001 = vmatprep.subr.mxu0 0.0
    %1002 = vmatpush1.msra.mxu0 %v984
    %1003 = vmatprep.subr.mxu0 0.0
    %1004 = vmatpush1.msra.mxu0 0.0
    %1005 = vmatprep.subr.mxu0 0.0
    %1006 = vmatpush1.msra.mxu0 0.0
    %1007 = vmatprep.subr.mxu0 0.0
    %1008 = vmatpush1.msra.mxu0 0.0
    %1009 = vmatprep.subr.mxu0 0.0
    %1010 = vmatpush1.msra.mxu0 0.0
    %1011 = vmatprep.subr.mxu0 0.0
    %1012 = vmatpush1.msra.mxu0 0.0
    %1013 = vmatprep.subr.mxu0 0.0
    %1014 = vmatpush1.msra.mxu0 0.0
    %1015 = vmatprep.subr.mxu0 0.0
    %1016 = vmatpush1.msra.mxu0 0.0
    %1017 = vmatprep.subr.mxu0 0.0
    %1018 = vmatpush1.msra.mxu0 0.0
    %1019 = vmatprep.subr.mxu0 0.0
    %1020 = vmatpush1.msra.mxu0 0.0
    %1021 = vmatprep.subr.mxu0 0.0
    %1022 = vmatpush1.msra.mxu0 0.0
    %1023 = vmatprep.subr.mxu0 0.0
    %1024 = vmatpush1.msra.mxu0 0.0
    %1025 = vmatprep.subr.mxu0 0.0
    %1026 = vmatpush1.msra.mxu0 0.0
    %1027 = vmatprep.subr.mxu0 0.0
    %1028 = vmatpush1.msra.mxu0 0.0
    %1029 = vmatprep.subr.mxu0 0.0
    %1030 = vmatpush1.msra.mxu0 0.0
    %1031 = vmatprep.subr.mxu0 0.0
    %1032 = vmatpush1.msra.mxu0 0.0
    %1033 = vmatprep.subr.mxu0 0.0
    %1034 = vmatpush1.msra.mxu0 0.0
    %1035 = vmatprep.subr.mxu0 0.0
    %1036 = vmatpush1.msra.mxu0 0.0
    %1037 = vmatprep.subr.mxu0 0.0
    %1038 = vmatpush1.msra.mxu0 0.0
    %1039 = vmatprep.subr.mxu0 0.0
    %1040 = vmatpush1.msra.mxu0 0.0
    %1041 = vmatprep.subr.mxu0 0.0
    %1042 = vmatpush1.msra.mxu0 0.0
    %1043 = vmatprep.subr.mxu0 0.0
    %1044 = vmatpush1.msra.mxu0 0.0
    %1045 = vmatprep.subr.mxu0 0.0
    %1046 = vmatpush1.msra.mxu0 0.0
    %1047 = vmatprep.subr.mxu0 0.0
    %1048 = vmatpush1.msra.mxu0 0.0
    %1049 = vmatprep.subr.mxu0 0.0
    %1050 = vmatpush1.msra.mxu0 0.0
    %1051 = vmatprep.subr.mxu0 0.0
    %1052 = vmatpush1.msra.mxu0 0.0
    %1053 = vmatprep.subr.mxu0 0.0
    %1054 = vmatpush1.msra.mxu0 0.0
    %1055 = vmatprep.subr.mxu0 0.0
    %1056 = vmatpush1.msra.mxu0 0.0
    %1057 = vmatprep.subr.mxu0 0.0
    %1058 = vmatpush1.msra.mxu0 0.0
    %1059 = vmatprep.mubr.f32.mxu0 0.0
    %1060 = vmatmul.mubr.f32.gmra.mrb[0].mxu0 %v990
    %v1061 = vpop.f32.mrb[0].mxu0
    %v1062 = vadd.f32 %v972, %v1061
    %v1063 = vpop.f32.mrb[0].mxu0
    %1064 = vmatprep.mubr.f32.mxu0 0.0
    %1065 = vmatmul.mubr.f32.gmra.mrb[0].mxu0 %v993
    %v1066 = vpop.f32.mrb[0].mxu0
    %v1067 = vadd.f32 %v972, %v1066
    %v1068 = vpop.f32.mrb[0].mxu0
    %1069 = vdwg.mxu0
    %v1070 = vadd.f32 %v32, %v1062
    %v1071 = vadd.f32 %v33, %v1067
    %v1072 = vsel %vm56, %v1070, 0.0
    %1073 = vadd.xlane.f32.xlu0 %v1072
    %v1074 = vpop.xlane.xlu0 %1073
    %v1075 = vsel %vm56, %v1071, 0.0
    %1076 = vadd.xlane.f32.xlu0 %v1075
    %v1077 = vpop.xlane.xlu0 %1076
    %v1078 = vrcp.pop 32.0
    %v1079 = vmul.f32 %v1074, %v1078
    %v1080 = vmul.f32 %v1077, %v1078
    %v1081 = vsub.f32 %v1070, %v1079
    %v1082 = vsub.f32 %v1071, %v1080
    %v1083 = vmul.f32 %v1081, %v1081
    %v1084 = vmul.f32 %v1082, %v1082
    %v1085 = vsel %vm56, %v1083, 0.0
    %1086 = vadd.xlane.f32.xlu0 %v1085
    %v1087 = vpop.xlane.xlu0 %1086
    %v1088 = vsel %vm56, %v1084, 0.0
    %1089 = vadd.xlane.f32.xlu0 %v1088
    %v1090 = vpop.xlane.xlu0 %1089
    %v1091 = vmul.f32 %v1087, %v1078
    %v1092 = vmul.f32 %v1090, %v1078
    %v1093 = vadd.f32 %v1091, 1e-05
    %v1094 = vadd.f32 %v1092, 1e-05
    %v1095 = vrsqrt.pop %v1093
    %v1096 = vrsqrt.pop %v1094
    %v1097 = vmul.f32 %v1081, %v1095
    %v1098 = vmul.f32 %v1082, %v1096
    %v1099 = vlaneseq
    %v1100 = vshrl.u32 %v1099, 7
    %v1101 = vsub.s32 0, %v1100
    %v1102 = vrot.slane %v44, %v1101
    %v1103 = vmul.f32 %v1097, %v1102
    %v1104 = vmul.f32 %v1098, %v1102
    %v1105 = vlaneseq
    %v1106 = vshrl.u32 %v1105, 7
    %v1107 = vsub.s32 0, %v1106
    %v1108 = vrot.slane %v45, %v1107
    %v1109 = vadd.f32 %v1103, %v1108
    %v1110 = vadd.f32 %v1104, %v1108
    %v1111 = vlaneseq
    %v1112 = vshrl.u32 %v1111, 7
    %v1113 = vsub.s32 0, %v1112
    %v1114 = vrot.slane %v46, %v1113
    %v1116 = vsel %vm56, %v1109, 0
    %v1119 = vsel %vm56, %v1110, 0
    %1121 = vmatprep.subr.mxu0 0.0
    %1122 = vmatpush1.msra.mxu0 %v38
    %1123 = vmatprep.subr.mxu0 0.0
    %1124 = vmatpush1.msra.mxu0 %v39
    %1125 = vmatprep.subr.mxu0 0.0
    %1126 = vmatpush1.msra.mxu0 %v40
    %1127 = vmatprep.subr.mxu0 0.0
    %1128 = vmatpush1.msra.mxu0 %v41
    %1129 = vmatprep.subr.mxu0 0.0
    %1130 = vmatpush1.msra.mxu0 0.0
    %1131 = vmatprep.subr.mxu0 0.0
    %1132 = vmatpush1.msra.mxu0 0.0
    %1133 = vmatprep.subr.mxu0 0.0
    %1134 = vmatpush1.msra.mxu0 0.0
    %1135 = vmatprep.subr.mxu0 0.0
    %1136 = vmatpush1.msra.mxu0 0.0
    %1137 = vmatprep.subr.mxu0 0.0
    %1138 = vmatpush1.msra.mxu0 0.0
    %1139 = vmatprep.subr.mxu0 0.0
    %1140 = vmatpush1.msra.mxu0 0.0
    %1141 = vmatprep.subr.mxu0 0.0
    %1142 = vmatpush1.msra.mxu0 0.0
    %1143 = vmatprep.subr.mxu0 0.0
    %1144 = vmatpush1.msra.mxu0 0.0
    %1145 = vmatprep.subr.mxu0 0.0
    %1146 = vmatpush1.msra.mxu0 0.0
    %1147 = vmatprep.subr.mxu0 0.0
    %1148 = vmatpush1.msra.mxu0 0.0
    %1149 = vmatprep.subr.mxu0 0.0
    %1150 = vmatpush1.msra.mxu0 0.0
    %1151 = vmatprep.subr.mxu0 0.0
    %1152 = vmatpush1.msra.mxu0 0.0
    %1153 = vmatprep.subr.mxu0 0.0
    %1154 = vmatpush1.msra.mxu0 0.0
    %1155 = vmatprep.subr.mxu0 0.0
    %1156 = vmatpush1.msra.mxu0 0.0
    %1157 = vmatprep.subr.mxu0 0.0
    %1158 = vmatpush1.msra.mxu0 0.0
    %1159 = vmatprep.subr.mxu0 0.0
    %1160 = vmatpush1.msra.mxu0 0.0
    %1161 = vmatprep.subr.mxu0 0.0
    %1162 = vmatpush1.msra.mxu0 0.0
    %1163 = vmatprep.subr.mxu0 0.0
    %1164 = vmatpush1.msra.mxu0 0.0
    %1165 = vmatprep.subr.mxu0 0.0
    %1166 = vmatpush1.msra.mxu0 0.0
    %1167 = vmatprep.subr.mxu0 0.0
    %1168 = vmatpush1.msra.mxu0 0.0
    %1169 = vmatprep.subr.mxu0 0.0
    %1170 = vmatpush1.msra.mxu0 0.0
    %1171 = vmatprep.subr.mxu0 0.0
    %1172 = vmatpush1.msra.mxu0 0.0
    %1173 = vmatprep.subr.mxu0 0.0
    %1174 = vmatpush1.msra.mxu0 0.0
    %1175 = vmatprep.subr.mxu0 0.0
    %1176 = vmatpush1.msra.mxu0 0.0
    %1177 = vmatprep.subr.mxu0 0.0
    %1178 = vmatpush1.msra.mxu0 0.0
    %1179 = vmatprep.subr.mxu0 0.0
    %1180 = vmatpush1.msra.mxu0 0.0
    %1181 = vmatprep.subr.mxu0 0.0
    %1182 = vmatpush1.msra.mxu0 0.0
    %1183 = vmatprep.subr.mxu0 0.0
    %1184 = vmatpush1.msra.mxu0 0.0
    %1185 = vmatprep.mubr.f32.mxu0 0.0
    %1186 = vmatmul.mubr.f32.gmra.mrb[0].mxu0 %v1116
    %v1187 = vpop.f32.mrb[0].mxu0
    %v1188 = vadd.f32 %v1114, %v1187
    %v1189 = vpop.f32.mrb[0].mxu0
    %1190 = vmatprep.mubr.f32.mxu0 0.0
    %1191 = vmatmul.mubr.f32.gmra.mrb[0].mxu0 %v1119
    %v1192 = vpop.f32.mrb[0].mxu0
    %v1193 = vadd.f32 %v1114, %v1192
    %v1194 = vpop.f32.mrb[0].mxu0
    %1195 = vdwg.mxu0
    %v1196 = vmax.f32 %v1188, 0.0
    %v1197 = vmax.f32 %v1193, 0.0
    %v1198 = vld [vmem:[%s2] sm:$0xff]
    %v1199 = vld [vmem:[%s2 + $0x8] sm:$0xff]
    %v1200 = vld [vmem:[%s2 + $0x10] sm:$0xff]
    %v1201 = vld [vmem:[%s2 + $0x18] sm:$0xff]
    %v1202 = vld [vmem:[%s2 + $0x20] sm:$0xff]
    %v1203 = vld [vmem:[%s2 + $0x28] sm:$0xff]
    %v1204 = vld [vmem:[%s2 + $0x30] sm:$0xff]
    %v1205 = vld [vmem:[%s2 + $0x38] sm:$0xff]
    %v1206 = vlaneseq
    %v1207 = vshrl.u32 %v1206, 7
    %v1208 = vsub.s32 0, %v1207
    %v1209 = vrot.slane %v47, %v1208
    %vm1210 = vcmask 523264
    %v1212 = vsel %vm1210, %v1196, 0
    %v1215 = vsel %vm1210, %v1197, 0
    %1217 = vmatprep.subr.mxu0 0.0
    %1218 = vmatpush1.msra.mxu0 %v1198
    %1219 = vmatprep.subr.mxu0 0.0
    %1220 = vmatpush1.msra.mxu0 %v1199
    %1221 = vmatprep.subr.mxu0 0.0
    %1222 = vmatpush1.msra.mxu0 %v1200
    %1223 = vmatprep.subr.mxu0 0.0
    %1224 = vmatpush1.msra.mxu0 %v1201
    %1225 = vmatprep.subr.mxu0 0.0
    %1226 = vmatpush1.msra.mxu0 %v1202
    %1227 = vmatprep.subr.mxu0 0.0
    %1228 = vmatpush1.msra.mxu0 %v1203
    %1229 = vmatprep.subr.mxu0 0.0
    %1230 = vmatpush1.msra.mxu0 %v1204
    %1231 = vmatprep.subr.mxu0 0.0
    %1232 = vmatpush1.msra.mxu0 %v1205
    %1233 = vmatprep.subr.mxu0 0.0
    %1234 = vmatpush1.msra.mxu0 0.0
    %1235 = vmatprep.subr.mxu0 0.0
    %1236 = vmatpush1.msra.mxu0 0.0
    %1237 = vmatprep.subr.mxu0 0.0
    %1238 = vmatpush1.msra.mxu0 0.0
    %1239 = vmatprep.subr.mxu0 0.0
    %1240 = vmatpush1.msra.mxu0 0.0
    %1241 = vmatprep.subr.mxu0 0.0
    %1242 = vmatpush1.msra.mxu0 0.0
    %1243 = vmatprep.subr.mxu0 0.0
    %1244 = vmatpush1.msra.mxu0 0.0
    %1245 = vmatprep.subr.mxu0 0.0
    %1246 = vmatpush1.msra.mxu0 0.0
    %1247 = vmatprep.subr.mxu0 0.0
    %1248 = vmatpush1.msra.mxu0 0.0
    %1249 = vmatprep.subr.mxu0 0.0
    %1250 = vmatpush1.msra.mxu0 0.0
    %1251 = vmatprep.subr.mxu0 0.0
    %1252 = vmatpush1.msra.mxu0 0.0
    %1253 = vmatprep.subr.mxu0 0.0
    %1254 = vmatpush1.msra.mxu0 0.0
    %1255 = vmatprep.subr.mxu0 0.0
    %1256 = vmatpush1.msra.mxu0 0.0
    %1257 = vmatprep.subr.mxu0 0.0
    %1258 = vmatpush1.msra.mxu0 0.0
    %1259 = vmatprep.subr.mxu0 0.0
    %1260 = vmatpush1.msra.mxu0 0.0
    %1261 = vmatprep.subr.mxu0 0.0
    %1262 = vmatpush1.msra.mxu0 0.0
    %1263 = vmatprep.subr.mxu0 0.0
    %1264 = vmatpush1.msra.mxu0 0.0
    %1265 = vmatprep.subr.mxu0 0.0
    %1266 = vmatpush1.msra.mxu0 0.0
    %1267 = vmatprep.subr.mxu0 0.0
    %1268 = vmatpush1.msra.mxu0 0.0
    %1269 = vmatprep.subr.mxu0 0.0
    %1270 = vmatpush1.msra.mxu0 0.0
    %1271 = vmatprep.subr.mxu0 0.0
    %1272 = vmatpush1.msra.mxu0 0.0
    %1273 = vmatprep.subr.mxu0 0.0
    %1274 = vmatpush1.msra.mxu0 0.0
    %1275 = vmatprep.subr.mxu0 0.0
    %1276 = vmatpush1.msra.mxu0 0.0
    %1277 = vmatprep.subr.mxu0 0.0
    %1278 = vmatpush1.msra.mxu0 0.0
    %1279 = vmatprep.subr.mxu0 0.0
    %1280 = vmatpush1.msra.mxu0 0.0
    %1281 = vmatprep.mubr.f32.mxu0 0.0
    %1282 = vmatmul.mubr.f32.gmra.mrb[0].mxu0 %v1212
    %v1283 = vpop.f32.mrb[0].mxu0
    %v1284 = vadd.f32 %v1209, %v1283
    %v1285 = vpop.f32.mrb[0].mxu0
    %1286 = vmatprep.mubr.f32.mxu0 0.0
    %1287 = vmatmul.mubr.f32.gmra.mrb[0].mxu0 %v1215
    %v1288 = vpop.f32.mrb[0].mxu0
    %v1289 = vadd.f32 %v1209, %v1288
    %v1290 = vpop.f32.mrb[0].mxu0
    %1291 = vdwg.mxu0
    %v1292 = vadd.f32 %v1109, %v1284
    %v1293 = vadd.f32 %v1110, %v1289
    %v1294 = vsel %vm56, %v1292, 0.0
    %1295 = vadd.xlane.f32.xlu0 %v1294
    %v1296 = vpop.xlane.xlu0 %1295
    %v1297 = vsel %vm56, %v1293, 0.0
    %1298 = vadd.xlane.f32.xlu0 %v1297
    %v1299 = vpop.xlane.xlu0 %1298
    %v1300 = vmul.f32 %v1296, %v1078
    %v1301 = vmul.f32 %v1299, %v1078
    %v1302 = vsub.f32 %v1292, %v1300
    %v1303 = vsub.f32 %v1293, %v1301
    %v1304 = vmul.f32 %v1302, %v1302
    %v1305 = vmul.f32 %v1303, %v1303
    %v1306 = vsel %vm56, %v1304, 0.0
    %1307 = vadd.xlane.f32.xlu0 %v1306
    %v1308 = vpop.xlane.xlu0 %1307
    %v1309 = vsel %vm56, %v1305, 0.0
    %1310 = vadd.xlane.f32.xlu0 %v1309
    %v1311 = vpop.xlane.xlu0 %1310
    %v1312 = vmul.f32 %v1308, %v1078
    %v1313 = vmul.f32 %v1311, %v1078
    %v1314 = vadd.f32 %v1312, 1e-05
    %v1315 = vadd.f32 %v1313, 1e-05
    %v1316 = vrsqrt.pop %v1314
    %v1317 = vrsqrt.pop %v1315
    %v1318 = vmul.f32 %v1302, %v1316
    %v1319 = vmul.f32 %v1303, %v1317
    %v1320 = vlaneseq
    %v1321 = vshrl.u32 %v1320, 7
    %v1322 = vsub.s32 0, %v1321
    %v1323 = vrot.slane %v48, %v1322
    %v1324 = vmul.f32 %v1318, %v1323
    %v1325 = vmul.f32 %v1319, %v1323
    %v1326 = vlaneseq
    %v1327 = vshrl.u32 %v1326, 7
    %v1328 = vsub.s32 0, %v1327
    %v1329 = vrot.slane %v49, %v1328
    %v1330 = vadd.f32 %v1324, %v1329
    %v1331 = vadd.f32 %v1325, %v1329
    %1332 = vst.msk [vmem:[#allocation5] sm:$0xff] %vm56, %v1330
    %1333 = vst.msk [vmem:[#allocation5 + $0x8] sm:$0xff] %vm56, %v1331
    // Predicated region
    $region22: #{tpu_custom_call.1} parent=1 // pred_check
      _
    $region23: #{tpu_custom_call.1} parent=1 // pred_check_branch
      %1335 = sbr.rel (0) target = $region25
    $region24: #{tpu_custom_call.1} parent=1 // pred_region
      %s1337 = ssub.s32 256, 256
      %1338 = vsyncadd [#allocation4], %s1337
      %s1339 = sshll.u32 [#allocation5], 4
      %s1340 = int_to_ptr.vmem [resolvable:$true] %s1339
      %1345 = dma.vmem_to_hbm [thread:$0]  %s1340, 256, %s4, [#allocation4], 128, 128, 8
    $region25: #{tpu_custom_call.1} parent=1 // pred_fallthru
      _
    // Predicated region
    $region26: #{tpu_custom_call.1} parent=1 // pred_check
      _
    $region27: #{tpu_custom_call.1} parent=1 // pred_check_branch
      %1347 = sbr.rel (0) target = $region29
    $region28: #{tpu_custom_call.1} parent=1 // pred_region
      %1348 = dma.done [#allocation4], 256
    $region29: #{tpu_custom_call.1} parent=1 // pred_fallthru
      _
    %1349 = vsyncpa [#allocation3], 1
    %1350 = vsyncpa [#allocation4], 1

</llo_original>
